<compile_context>
chip_gen: v7x
topology: tpu7x:2x2x1
jax: 0.10.0
libtpu: 0.0.40
codegen_flags: <defaults>
</compile_context>

<pallas_src>
import functools
import math

import jax
import jax.numpy as jnp
import numpy as np
from jax.experimental import pallas as pl
from jax.experimental.pallas import tpu as pltpu

EPS = 1e-5
_INV_SQRT2 = 1.0 / math.sqrt(2.0)


def _layernorm(x, gamma, beta):
    # x: (..., D) f32, gamma/beta: (D,) f32 — PyTorch LayerNorm (biased var).
    mean = jnp.mean(x, axis=-1, keepdims=True)
    var = jnp.mean(jnp.square(x - mean), axis=-1, keepdims=True)
    return (x - mean) * jax.lax.rsqrt(var + EPS) * gamma + beta


def _pick_vmem_limit():
    # ~85% of physical VMEM with headroom; safe fallback if query unavailable.
    try:
        cap = int(pltpu.get_tpu_info().vmem_capacity_bytes)
        return min(cap - 8 * 1024 * 1024, int(cap * 0.85))
    except Exception:
        return 48 * 1024 * 1024


# ---------------------------------------------------------------------------
# Fused per-layer kernel (one q tile per grid step):
#   y = x + Attn(LN1(x));  out = y + FF(LN2(y))
# K/V (and LN1 of the full sequence) are computed once per batch element and
# cached in VMEM scratch across q tiles.
# ---------------------------------------------------------------------------
def transformer_layer_kernel(x_ref, g1_ref, b1_ref,
                             wq_ref, wk_ref, wv_ref, wo_ref, bo_ref,
                             g2_ref, b2_ref, w1_ref, bf1_ref, w2_ref, bf2_ref,
                             o_ref,
                             xn_buf, k_buf, v_buf,
                             *, heads, dim_head, scale, q_tile):
    qi = pl.program_id(1)
    q_start = pl.multiple_of(qi * q_tile, q_tile)

    # ---- once per batch element: full-sequence LN1 + K/V projections --------
    @pl.when(qi == 0)
    def _():
        xn = _layernorm(x_ref[0], g1_ref[0], b1_ref[0])          # (N, D) f32
        xn_buf[...] = xn                                          # cache for Q slices
        xn_bf = xn.astype(jnp.bfloat16)
        k_buf[...] = jnp.dot(
            xn_bf, wk_ref[...],
            preferred_element_type=jnp.float32).astype(jnp.bfloat16)   # (N, inner)
        v_buf[...] = jnp.dot(
            xn_bf, wv_ref[...],
            preferred_element_type=jnp.float32).astype(jnp.bfloat16)   # (N, inner)

    # ---- per q tile ----------------------------------------------------------
    x_q = x_ref[0, pl.ds(q_start, q_tile), :]                     # (tq, D) f32 residual
    xn_q = xn_buf[pl.ds(q_start, q_tile), :]                      # (tq, D) f32 (cached LN1)

    # Q projection; fold the softmax scale into Q once, cast to bf16 once.
    q = jnp.dot(xn_q.astype(jnp.bfloat16), wq_ref[...],
                preferred_element_type=jnp.float32) * scale       # (tq, inner) f32
    q_bf = q.astype(jnp.bfloat16)

    # Per-head attention with direct accumulation into the output projection
    # (no lane-dim concat of sub-128 head slices).
    acc = x_q + bo_ref[0]                                         # (tq, D) f32
    for h in range(heads):
        lo = h * dim_head
        qh = q_bf[:, lo:lo + dim_head]                            # (tq, dh) bf16
        kh = k_buf[:, lo:lo + dim_head]                           # (N, dh)  bf16
        vh = v_buf[:, lo:lo + dim_head]                           # (N, dh)  bf16
        scores = jax.lax.dot_general(
            qh, kh, (((1,), (1,)), ((), ())),
            preferred_element_type=jnp.float32)                   # (tq, N) f32
        m = jnp.max(scores, axis=-1, keepdims=True)
        e = jnp.exp(scores - m)
        denom = jnp.sum(e, axis=-1, keepdims=True)
        pv = jnp.dot(e.astype(jnp.bfloat16), vh,
                     preferred_element_type=jnp.float32)          # (tq, dh) f32
        oh = pv * pl.reciprocal(denom, approx=True)               # normalize after PV
        acc = acc + jnp.dot(oh.astype(jnp.bfloat16),
                            wo_ref[lo:lo + dim_head, :],
                            preferred_element_type=jnp.float32)   # (tq, D)
    y1 = acc                                                      # attn out-proj + bias + residual

    # PreNorm FeedForward + residual (exact GELU to match nn.GELU default).
    y1n_bf = _layernorm(y1, g2_ref[0], b2_ref[0]).astype(jnp.bfloat16)
    hid = jnp.dot(y1n_bf, w1_ref[...],
                  preferred_element_type=jnp.float32) + bf1_ref[0]
    hid = 0.5 * hid * (1.0 + jax.lax.erf(hid * _INV_SQRT2))
    y2 = jnp.dot(hid.astype(jnp.bfloat16), w2_ref[...],
                 preferred_element_type=jnp.float32) + bf2_ref[0] + y1

    o_ref[0] = y2.astype(o_ref.dtype)


def transformer_layer(x, p, *, heads, dim_head, q_tile=None):
    B, N, D = x.shape
    inner = heads * dim_head
    H = p["w1"].shape[1]
    if q_tile is None:
        q_tile = N
    assert N % q_tile == 0, "sequence length must be divisible by q_tile"
    assert q_tile == N or q_tile % 8 == 0, "q_tile must be a multiple of 8"
    nq = N // q_tile
    scale = dim_head ** (-0.5)

    kernel = functools.partial(transformer_layer_kernel, heads=heads,
                               dim_head=dim_head, scale=scale, q_tile=q_tile)

    def vec(d):
        return pl.BlockSpec((1, d), lambda b, qi: (0, 0))

    def mat(r, c):
        return pl.BlockSpec((r, c), lambda b, qi: (0, 0))

    return pl.pallas_call(
        kernel,
        out_shape=jax.ShapeDtypeStruct((B, N, D), x.dtype),
        grid_spec=pltpu.PrefetchScalarGridSpec(
            num_scalar_prefetch=0,
            grid=(B, nq),
            in_specs=[
                # full-sequence activation for one batch element (K/V source);
                # constant along the q axis -> DMA'd once per batch step.
                pl.BlockSpec((1, N, D), lambda b, qi: (b, 0, 0)),
                vec(D), vec(D),                               # LN1 gamma / beta (f32)
                mat(D, inner), mat(D, inner), mat(D, inner),  # Wq, Wk, Wv (bf16)
                mat(inner, D), vec(D),                        # Wout (bf16), bout (f32)
                vec(D), vec(D),                               # LN2 gamma / beta (f32)
                mat(D, H), vec(H),                            # W1 (bf16), b1 (f32)
                mat(H, D), vec(D),                            # W2 (bf16), b2 (f32)
            ],
            out_specs=pl.BlockSpec((1, q_tile, D), lambda b, qi: (b, qi, 0)),
            scratch_shapes=[
                pltpu.VMEM((N, D), jnp.float32),        # xn_buf: LN1(x) full sequence
                pltpu.VMEM((N, inner), jnp.bfloat16),   # k_buf
                pltpu.VMEM((N, inner), jnp.bfloat16),   # v_buf
            ],
        ),
        compiler_params=pltpu.CompilerParams(
            # q axis must be "arbitrary": K/V scratch is filled at qi==0 and
            # reused by the following q tiles of the same batch element.
            dimension_semantics=("parallel", "arbitrary"),
            vmem_limit_bytes=_pick_vmem_limit()),
    )(x, p["ln1_g"], p["ln1_b"], p["wq"], p["wk"], p["wv"], p["wout"],
      p["bout"], p["ln2_g"], p["ln2_b"], p["w1"], p["b1"], p["w2"], p["b2"])


# ---------------------------------------------------------------------------
# Transformer forward (depth layers)
# ---------------------------------------------------------------------------
def transformer_forward(x, kernel_layers, *, heads, dim_head, q_tile=None):
    # TODO(synk): selfatt=False (cross-attention, z != None) path not implemented.
    for p in kernel_layers:
        x = transformer_layer(x, p, heads=heads, dim_head=dim_head, q_tile=q_tile)
    return x


def prepare_kernel_params(layers_f32):
    """Split fused QKV weight and cast matmul weights to bf16 for the MXU."""
    out = []
    for p in layers_f32:
        wq, wk, wv = jnp.split(p["wqkv"], 3, axis=1)
        out.append(dict(
            ln1_g=p["ln1_g"], ln1_b=p["ln1_b"],
            wq=wq.astype(jnp.bfloat16),
            wk=wk.astype(jnp.bfloat16),
            wv=wv.astype(jnp.bfloat16),
            wout=p["wout"].astype(jnp.bfloat16), bout=p["bout"],
            ln2_g=p["ln2_g"], ln2_b=p["ln2_b"],
            w1=p["w1"].astype(jnp.bfloat16), b1=p["b1"],
            w2=p["w2"].astype(jnp.bfloat16), b2=p["b2"],
        ))
    return out


# ---------------------------------------------------------------------------
# Pure-JAX f32 reference (matches the PyTorch module semantics)
# ---------------------------------------------------------------------------
def transformer_reference(x, layers, *, heads, dim_head):
    scale = dim_head ** (-0.5)
    inner = heads * dim_head
    for p in layers:
        xn = _layernorm(x, p["ln1_g"][0], p["ln1_b"][0])
        qkv = xn @ p["wqkv"]
        q, k, v = jnp.split(qkv, 3, axis=-1)

        def sh(t):
            B, N, _ = t.shape
            return jnp.transpose(t.reshape(B, N, heads, dim_head), (0, 2, 1, 3))

        q, k, v = sh(q), sh(k), sh(v)
        dots = jnp.einsum('bhnd,bhmd->bhnm', q, k) * scale
        attn = jax.nn.softmax(dots, axis=-1)
        out = jnp.einsum('bhnm,bhmd->bhnd', attn, v)
        B, _, N, _ = out.shape
        out = jnp.transpose(out, (0, 2, 1, 3)).reshape(B, N, inner)
        x = out @ p["wout"] + p["bout"][0] + x

        xn = _layernorm(x, p["ln2_g"][0], p["ln2_b"][0])
        h = xn @ p["w1"] + p["b1"][0]
        h = 0.5 * h * (1.0 + jax.lax.erf(h * _INV_SQRT2))
        x = h @ p["w2"] + p["b2"][0] + x
    return x


def init_params(key, depth, dim, heads, dim_head, mlp_dim):
    inner = heads * dim_head
    layers = []
    for _ in range(depth):
        keys = jax.random.split(key, 8)
        key = keys[-1]
        layers.append(dict(
            ln1_g=jnp.ones((1, dim), jnp.float32),
            ln1_b=jnp.zeros((1, dim), jnp.float32),
            wqkv=0.02 * jax.random.normal(keys[0], (dim, 3 * inner), jnp.float32),
            wout=0.02 * jax.random.normal(keys[1], (inner, dim), jnp.float32),
            bout=0.02 * jax.random.normal(keys[2], (1, dim), jnp.float32),
            ln2_g=jnp.ones((1, dim), jnp.float32),
            ln2_b=jnp.zeros((1, dim), jnp.float32),
            w1=0.02 * jax.random.normal(keys[3], (dim, mlp_dim), jnp.float32),
            b1=0.02 * jax.random.normal(keys[4], (1, mlp_dim), jnp.float32),
            w2=0.02 * jax.random.normal(keys[5], (mlp_dim, dim), jnp.float32),
            b2=0.02 * jax.random.normal(keys[6], (1, dim), jnp.float32),
        ))
    return layers


if __name__ == "__main__":
    B, N, D = 2, 16, 32          # batch, seq, dim
    depth, heads, dim_head, mlp_dim = 2, 4, 8, 64
    q_tile = 8                   # exercises the q-tiled path (grid=(B, N//q_tile))

    key = jax.random.PRNGKey(0)
    kx, kp = jax.random.split(key)
    x = jax.random.normal(kx, (B, N, D), jnp.float32)
    layers_f32 = init_params(kp, depth, D, heads, dim_head, mlp_dim)
    kernel_layers = prepare_kernel_params(layers_f32)

    out = transformer_forward(x, kernel_layers, heads=heads,
                              dim_head=dim_head, q_tile=q_tile)
    out = jax.block_until_ready(out)

    ref = transformer_reference(x, layers_f32, heads=heads, dim_head=dim_head)
    # kernel uses bf16 MXU operands + approx reciprocal; compare to f32 ref
    # with a tolerance that reflects bf16 matmul precision.
    np.testing.assert_allclose(np.asarray(out), np.asarray(ref),
                               rtol=1e-2, atol=1e-2)
    print("KERNEL_OK")
</pallas_src>

<mosaic_0001>
module attributes {stable_mosaic.version = 11 : i64} {
  func.func @transformer_layer_kernel(%arg0: i32, %arg1: i32, %arg2: memref<1x16x32xf32, #tpu.memory_space<vmem>>, %arg3: memref<1x32xf32, #tpu.memory_space<vmem>>, %arg4: memref<1x32xf32, #tpu.memory_space<vmem>>, %arg5: memref<32x32xbf16, #tpu.memory_space<vmem>>, %arg6: memref<32x32xbf16, #tpu.memory_space<vmem>>, %arg7: memref<32x32xbf16, #tpu.memory_space<vmem>>, %arg8: memref<32x32xbf16, #tpu.memory_space<vmem>>, %arg9: memref<1x32xf32, #tpu.memory_space<vmem>>, %arg10: memref<1x32xf32, #tpu.memory_space<vmem>>, %arg11: memref<1x32xf32, #tpu.memory_space<vmem>>, %arg12: memref<32x64xbf16, #tpu.memory_space<vmem>>, %arg13: memref<1x64xf32, #tpu.memory_space<vmem>>, %arg14: memref<64x32xbf16, #tpu.memory_space<vmem>>, %arg15: memref<1x32xf32, #tpu.memory_space<vmem>>, %arg16: memref<1x8x32xf32, #tpu.memory_space<vmem>>, %arg17: memref<16x32xf32, #tpu.memory_space<vmem>>, %arg18: memref<16x32xbf16, #tpu.memory_space<vmem>>, %arg19: memref<16x32xbf16, #tpu.memory_space<vmem>>) attributes {dimension_semantics = [#tpu.dimension_semantics<parallel>, #tpu.dimension_semantics<arbitrary>], iteration_bounds = array<i64: 2, 2>, scalar_prefetch = 0 : i64, scratch_operands = 3 : i64, tpu.core_type = #tpu.core_type<tc>, window_params = [{transform_indices = @transform_0, window_bounds = array<i64: 1, 16, 32>}, {pipeline_mode = #tpu.pipeline_mode<synchronous>, transform_indices = @transform_1, window_bounds = array<i64: 1, 32>}, {pipeline_mode = #tpu.pipeline_mode<synchronous>, transform_indices = @transform_2, window_bounds = array<i64: 1, 32>}, {pipeline_mode = #tpu.pipeline_mode<synchronous>, transform_indices = @transform_3, window_bounds = array<i64: 32, 32>}, {pipeline_mode = #tpu.pipeline_mode<synchronous>, transform_indices = @transform_4, window_bounds = array<i64: 32, 32>}, {pipeline_mode = #tpu.pipeline_mode<synchronous>, transform_indices = @transform_5, window_bounds = array<i64: 32, 32>}, {pipeline_mode = #tpu.pipeline_mode<synchronous>, transform_indices = @transform_6, window_bounds = array<i64: 32, 32>}, {pipeline_mode = #tpu.pipeline_mode<synchronous>, transform_indices = @transform_7, window_bounds = array<i64: 1, 32>}, {pipeline_mode = #tpu.pipeline_mode<synchronous>, transform_indices = @transform_8, window_bounds = array<i64: 1, 32>}, {pipeline_mode = #tpu.pipeline_mode<synchronous>, transform_indices = @transform_9, window_bounds = array<i64: 1, 32>}, {pipeline_mode = #tpu.pipeline_mode<synchronous>, transform_indices = @transform_10, window_bounds = array<i64: 32, 64>}, {pipeline_mode = #tpu.pipeline_mode<synchronous>, transform_indices = @transform_11, window_bounds = array<i64: 1, 64>}, {pipeline_mode = #tpu.pipeline_mode<synchronous>, transform_indices = @transform_12, window_bounds = array<i64: 64, 32>}, {pipeline_mode = #tpu.pipeline_mode<synchronous>, transform_indices = @transform_13, window_bounds = array<i64: 1, 32>}, {transform_indices = @transform_14, window_bounds = array<i64: 1, 8, 32>}]} {
    %c8_i32 = arith.constant 8 : i32
    %0 = arith.muli %arg1, %c8_i32 : i32
    %1 = tpu.assume_multiple %0, 8 : i32
    %c0_i32 = arith.constant 0 : i32
    %2 = arith.cmpi eq, %arg1, %c0_i32 : i32
    %3 = arith.extui %2 : i1 to i32
    %c0_i32_0 = arith.constant 0 : i32
    %4 = arith.cmpi ne, %3, %c0_i32_0 : i32
    scf.if %4 {
      %c0_74 = arith.constant 0 : index
      %c0_75 = arith.constant 0 : index
      %c0_76 = arith.constant 0 : index
      %157 = vector.load %arg2[%c0_74, %c0_75, %c0_76] : memref<1x16x32xf32, #tpu.memory_space<vmem>>, vector<1x16x32xf32>
      %158 = vector.shape_cast %157 : vector<1x16x32xf32> to vector<16x32xf32>
      %c0_77 = arith.constant 0 : index
      %c0_78 = arith.constant 0 : index
      %159 = vector.load %arg3[%c0_77, %c0_78] : memref<1x32xf32, #tpu.memory_space<vmem>>, vector<1x32xf32>
      %160 = vector.shape_cast %159 : vector<1x32xf32> to vector<32xf32>
      %c0_79 = arith.constant 0 : index
      %c0_80 = arith.constant 0 : index
      %161 = vector.load %arg4[%c0_79, %c0_80] : memref<1x32xf32, #tpu.memory_space<vmem>>, vector<1x32xf32>
      %162 = vector.shape_cast %161 : vector<1x32xf32> to vector<32xf32>
      %cst_81 = arith.constant dense<0.000000e+00> : vector<16xf32>
      %163 = vector.multi_reduction <add>, %158, %cst_81 [1] : vector<16x32xf32> to vector<16xf32>
      %164 = vector.shape_cast %163 : vector<16xf32> to vector<16x1xf32>
      %cst_82 = arith.constant 3.200000e+01 : f32
      %165 = vector.broadcast %cst_82 : f32 to vector<16x1xf32>
      %166 = arith.divf %164, %165 : vector<16x1xf32>
      %167 = vector.broadcast %166 : vector<16x1xf32> to vector<16x32xf32>
      %168 = arith.subf %158, %167 : vector<16x32xf32>
      %169 = arith.mulf %168, %168 : vector<16x32xf32>
      %cst_83 = arith.constant dense<0.000000e+00> : vector<16xf32>
      %170 = vector.multi_reduction <add>, %169, %cst_83 [1] : vector<16x32xf32> to vector<16xf32>
      %171 = vector.shape_cast %170 : vector<16xf32> to vector<16x1xf32>
      %cst_84 = arith.constant 3.200000e+01 : f32
      %172 = vector.broadcast %cst_84 : f32 to vector<16x1xf32>
      %173 = arith.divf %171, %172 : vector<16x1xf32>
      %174 = vector.broadcast %166 : vector<16x1xf32> to vector<16x32xf32>
      %175 = arith.subf %158, %174 : vector<16x32xf32>
      %cst_85 = arith.constant 9.99999974E-6 : f32
      %176 = vector.broadcast %cst_85 : f32 to vector<16x1xf32>
      %177 = arith.addf %173, %176 : vector<16x1xf32>
      %178 = math.rsqrt %177 : vector<16x1xf32>
      %179 = vector.broadcast %178 : vector<16x1xf32> to vector<16x32xf32>
      %180 = arith.mulf %175, %179 : vector<16x32xf32>
      %181 = vector.shape_cast %160 : vector<32xf32> to vector<1x32xf32>
      %182 = vector.broadcast %181 : vector<1x32xf32> to vector<16x32xf32>
      %183 = arith.mulf %180, %182 : vector<16x32xf32>
      %184 = vector.shape_cast %162 : vector<32xf32> to vector<1x32xf32>
      %185 = vector.broadcast %184 : vector<1x32xf32> to vector<16x32xf32>
      %186 = arith.addf %183, %185 : vector<16x32xf32>
      %c0_86 = arith.constant 0 : index
      %c0_87 = arith.constant 0 : index
      %187 = vector.load %arg17[%c0_86, %c0_87] : memref<16x32xf32, #tpu.memory_space<vmem>>, vector<16x32xf32>
      tpu.vector_store %arg17[%c0_86, %c0_87], %186 {strides = array<i32>} : memref<16x32xf32, #tpu.memory_space<vmem>>, vector<16x32xf32>,
      %188 = arith.truncf %186 : vector<16x32xf32> to vector<16x32xbf16>
      %c0_88 = arith.constant 0 : index
      %c0_89 = arith.constant 0 : index
      %189 = vector.load %arg6[%c0_88, %c0_89] : memref<32x32xbf16, #tpu.memory_space<vmem>>, vector<32x32xbf16>
      %cst_90 = arith.constant dense<0.000000e+00> : vector<16x32xf32>
      %190 = tpu.matmul %188, %189, %cst_90 {dimension_numbers = #tpu.dot_dimension_numbers<[1], [0], [0], [1], [0, 0, 1, 1], [], []>} : vector<16x32xbf16>, vector<32x32xbf16>, vector<16x32xf32> -> vector<16x32xf32>
      %191 = arith.truncf %190 : vector<16x32xf32> to vector<16x32xbf16>
      %c0_91 = arith.constant 0 : index
      %c0_92 = arith.constant 0 : index
      %192 = vector.load %arg18[%c0_91, %c0_92] : memref<16x32xbf16, #tpu.memory_space<vmem>>, vector<16x32xbf16>
      tpu.vector_store %arg18[%c0_91, %c0_92], %191 {strides = array<i32>} : memref<16x32xbf16, #tpu.memory_space<vmem>>, vector<16x32xbf16>,
      %c0_93 = arith.constant 0 : index
      %c0_94 = arith.constant 0 : index
      %193 = vector.load %arg7[%c0_93, %c0_94] : memref<32x32xbf16, #tpu.memory_space<vmem>>, vector<32x32xbf16>
      %cst_95 = arith.constant dense<0.000000e+00> : vector<16x32xf32>
      %194 = tpu.matmul %188, %193, %cst_95 {dimension_numbers = #tpu.dot_dimension_numbers<[1], [0], [0], [1], [0, 0, 1, 1], [], []>} : vector<16x32xbf16>, vector<32x32xbf16>, vector<16x32xf32> -> vector<16x32xf32>
      %195 = arith.truncf %194 : vector<16x32xf32> to vector<16x32xbf16>
      %c0_96 = arith.constant 0 : index
      %c0_97 = arith.constant 0 : index
      %196 = vector.load %arg19[%c0_96, %c0_97] : memref<16x32xbf16, #tpu.memory_space<vmem>>, vector<16x32xbf16>
      tpu.vector_store %arg19[%c0_96, %c0_97], %195 {strides = array<i32>} : memref<16x32xbf16, #tpu.memory_space<vmem>>, vector<16x32xbf16>,
    } else {
    }
    %c0 = arith.constant 0 : index
    %5 = arith.index_cast %1 : i32 to index
    %c0_1 = arith.constant 0 : index
    %6 = vector.load %arg2[%c0, %5, %c0_1] : memref<1x16x32xf32, #tpu.memory_space<vmem>>, vector<1x8x32xf32>
    %7 = vector.shape_cast %6 : vector<1x8x32xf32> to vector<8x32xf32>
    %8 = arith.index_cast %1 : i32 to index
    %c0_2 = arith.constant 0 : index
    %9 = vector.load %arg17[%8, %c0_2] : memref<16x32xf32, #tpu.memory_space<vmem>>, vector<8x32xf32>
    %10 = arith.truncf %9 : vector<8x32xf32> to vector<8x32xbf16>
    %c0_3 = arith.constant 0 : index
    %c0_4 = arith.constant 0 : index
    %11 = vector.load %arg5[%c0_3, %c0_4] : memref<32x32xbf16, #tpu.memory_space<vmem>>, vector<32x32xbf16>
    %cst = arith.constant dense<0.000000e+00> : vector<8x32xf32>
    %12 = tpu.matmul %10, %11, %cst {dimension_numbers = #tpu.dot_dimension_numbers<[1], [0], [0], [1], [0, 0, 1, 1], [], []>} : vector<8x32xbf16>, vector<32x32xbf16>, vector<8x32xf32> -> vector<8x32xf32>
    %cst_5 = arith.constant 0.353553385 : f32
    %13 = vector.broadcast %cst_5 : f32 to vector<8x32xf32>
    %14 = arith.mulf %12, %13 : vector<8x32xf32>
    %15 = arith.truncf %14 : vector<8x32xf32> to vector<8x32xbf16>
    %c0_6 = arith.constant 0 : index
    %c0_7 = arith.constant 0 : index
    %16 = vector.load %arg9[%c0_6, %c0_7] : memref<1x32xf32, #tpu.memory_space<vmem>>, vector<1x32xf32>
    %17 = vector.shape_cast %16 : vector<1x32xf32> to vector<32xf32>
    %18 = vector.shape_cast %17 : vector<32xf32> to vector<1x32xf32>
    %19 = vector.broadcast %18 : vector<1x32xf32> to vector<8x32xf32>
    %20 = arith.addf %7, %19 : vector<8x32xf32>
    %21 = vector.extract_strided_slice %15 {offsets = [0, 0], sizes = [8, 8], strides = [1, 1]} : vector<8x32xbf16> to vector<8x8xbf16>
    %c0_8 = arith.constant 0 : index
    %c0_9 = arith.constant 0 : index
    %22 = vector.load %arg18[%c0_8, %c0_9] : memref<16x32xbf16, #tpu.memory_space<vmem>>, vector<16x8xbf16>
    %c0_10 = arith.constant 0 : index
    %c0_11 = arith.constant 0 : index
    %23 = vector.load %arg19[%c0_10, %c0_11] : memref<16x32xbf16, #tpu.memory_space<vmem>>, vector<16x8xbf16>
    %cst_12 = arith.constant dense<0.000000e+00> : vector<8x16xf32>
    %24 = tpu.matmul %21, %22, %cst_12 {dimension_numbers = #tpu.dot_dimension_numbers<[1], [1], [0], [0], [0, 0, 1, 0], [], []>} : vector<8x8xbf16>, vector<16x8xbf16>, vector<8x16xf32> -> vector<8x16xf32>
    %cst_13 = arith.constant dense<0xFF800000> : vector<8xf32>
    %25 = vector.multi_reduction <maximumf>, %24, %cst_13 [1] : vector<8x16xf32> to vector<8xf32>
    %26 = vector.shape_cast %25 : vector<8xf32> to vector<8x1xf32>
    %27 = vector.broadcast %26 : vector<8x1xf32> to vector<8x16xf32>
    %28 = arith.subf %24, %27 : vector<8x16xf32>
    %29 = math.exp %28 : vector<8x16xf32>
    %cst_14 = arith.constant dense<0.000000e+00> : vector<8xf32>
    %30 = vector.multi_reduction <add>, %29, %cst_14 [1] : vector<8x16xf32> to vector<8xf32>
    %31 = vector.shape_cast %30 : vector<8xf32> to vector<8x1xf32>
    %32 = arith.truncf %29 : vector<8x16xf32> to vector<8x16xbf16>
    %cst_15 = arith.constant dense<0.000000e+00> : vector<8x8xf32>
    %33 = tpu.matmul %32, %23, %cst_15 {dimension_numbers = #tpu.dot_dimension_numbers<[1], [0], [0], [1], [0, 0, 1, 1], [], []>} : vector<8x16xbf16>, vector<16x8xbf16>, vector<8x8xf32> -> vector<8x8xf32>
    %34 = tpu.reciprocal %31 {approx = true} : vector<8x1xf32> -> vector<8x1xf32>
    %35 = vector.broadcast %34 : vector<8x1xf32> to vector<8x8xf32>
    %36 = arith.mulf %33, %35 : vector<8x8xf32>
    %37 = arith.truncf %36 : vector<8x8xf32> to vector<8x8xbf16>
    %c0_16 = arith.constant 0 : index
    %c0_17 = arith.constant 0 : index
    %38 = vector.load %arg8[%c0_16, %c0_17] : memref<32x32xbf16, #tpu.memory_space<vmem>>, vector<8x32xbf16>
    %cst_18 = arith.constant dense<0.000000e+00> : vector<8x32xf32>
    %39 = tpu.matmul %37, %38, %cst_18 {dimension_numbers = #tpu.dot_dimension_numbers<[1], [0], [0], [1], [0, 0, 1, 1], [], []>} : vector<8x8xbf16>, vector<8x32xbf16>, vector<8x32xf32> -> vector<8x32xf32>
    %40 = arith.addf %20, %39 : vector<8x32xf32>
    %41 = vector.extract_strided_slice %15 {offsets = [0, 8], sizes = [8, 8], strides = [1, 1]} : vector<8x32xbf16> to vector<8x8xbf16>
    %c0_19 = arith.constant 0 : index
    %c8 = arith.constant 8 : index
    %42 = vector.load %arg18[%c0_19, %c8] : memref<16x32xbf16, #tpu.memory_space<vmem>>, vector<16x8xbf16>
    %c0_20 = arith.constant 0 : index
    %c8_21 = arith.constant 8 : index
    %43 = vector.load %arg19[%c0_20, %c8_21] : memref<16x32xbf16, #tpu.memory_space<vmem>>, vector<16x8xbf16>
    %cst_22 = arith.constant dense<0.000000e+00> : vector<8x16xf32>
    %44 = tpu.matmul %41, %42, %cst_22 {dimension_numbers = #tpu.dot_dimension_numbers<[1], [1], [0], [0], [0, 0, 1, 0], [], []>} : vector<8x8xbf16>, vector<16x8xbf16>, vector<8x16xf32> -> vector<8x16xf32>
    %cst_23 = arith.constant dense<0xFF800000> : vector<8xf32>
    %45 = vector.multi_reduction <maximumf>, %44, %cst_23 [1] : vector<8x16xf32> to vector<8xf32>
    %46 = vector.shape_cast %45 : vector<8xf32> to vector<8x1xf32>
    %47 = vector.broadcast %46 : vector<8x1xf32> to vector<8x16xf32>
    %48 = arith.subf %44, %47 : vector<8x16xf32>
    %49 = math.exp %48 : vector<8x16xf32>
    %cst_24 = arith.constant dense<0.000000e+00> : vector<8xf32>
    %50 = vector.multi_reduction <add>, %49, %cst_24 [1] : vector<8x16xf32> to vector<8xf32>
    %51 = vector.shape_cast %50 : vector<8xf32> to vector<8x1xf32>
    %52 = arith.truncf %49 : vector<8x16xf32> to vector<8x16xbf16>
    %cst_25 = arith.constant dense<0.000000e+00> : vector<8x8xf32>
    %53 = tpu.matmul %52, %43, %cst_25 {dimension_numbers = #tpu.dot_dimension_numbers<[1], [0], [0], [1], [0, 0, 1, 1], [], []>} : vector<8x16xbf16>, vector<16x8xbf16>, vector<8x8xf32> -> vector<8x8xf32>
    %54 = tpu.reciprocal %51 {approx = true} : vector<8x1xf32> -> vector<8x1xf32>
    %55 = vector.broadcast %54 : vector<8x1xf32> to vector<8x8xf32>
    %56 = arith.mulf %53, %55 : vector<8x8xf32>
    %57 = arith.truncf %56 : vector<8x8xf32> to vector<8x8xbf16>
    %c8_26 = arith.constant 8 : index
    %c0_27 = arith.constant 0 : index
    %58 = vector.load %arg8[%c8_26, %c0_27] : memref<32x32xbf16, #tpu.memory_space<vmem>>, vector<8x32xbf16>
    %cst_28 = arith.constant dense<0.000000e+00> : vector<8x32xf32>
    %59 = tpu.matmul %57, %58, %cst_28 {dimension_numbers = #tpu.dot_dimension_numbers<[1], [0], [0], [1], [0, 0, 1, 1], [], []>} : vector<8x8xbf16>, vector<8x32xbf16>, vector<8x32xf32> -> vector<8x32xf32>
    %60 = arith.addf %40, %59 : vector<8x32xf32>
    %61 = vector.extract_strided_slice %15 {offsets = [0, 16], sizes = [8, 8], strides = [1, 1]} : vector<8x32xbf16> to vector<8x8xbf16>
    %c0_29 = arith.constant 0 : index
    %c16 = arith.constant 16 : index
    %62 = vector.load %arg18[%c0_29, %c16] : memref<16x32xbf16, #tpu.memory_space<vmem>>, vector<16x8xbf16>
    %c0_30 = arith.constant 0 : index
    %c16_31 = arith.constant 16 : index
    %63 = vector.load %arg19[%c0_30, %c16_31] : memref<16x32xbf16, #tpu.memory_space<vmem>>, vector<16x8xbf16>
    %cst_32 = arith.constant dense<0.000000e+00> : vector<8x16xf32>
    %64 = tpu.matmul %61, %62, %cst_32 {dimension_numbers = #tpu.dot_dimension_numbers<[1], [1], [0], [0], [0, 0, 1, 0], [], []>} : vector<8x8xbf16>, vector<16x8xbf16>, vector<8x16xf32> -> vector<8x16xf32>
    %cst_33 = arith.constant dense<0xFF800000> : vector<8xf32>
    %65 = vector.multi_reduction <maximumf>, %64, %cst_33 [1] : vector<8x16xf32> to vector<8xf32>
    %66 = vector.shape_cast %65 : vector<8xf32> to vector<8x1xf32>
    %67 = vector.broadcast %66 : vector<8x1xf32> to vector<8x16xf32>
    %68 = arith.subf %64, %67 : vector<8x16xf32>
    %69 = math.exp %68 : vector<8x16xf32>
    %cst_34 = arith.constant dense<0.000000e+00> : vector<8xf32>
    %70 = vector.multi_reduction <add>, %69, %cst_34 [1] : vector<8x16xf32> to vector<8xf32>
    %71 = vector.shape_cast %70 : vector<8xf32> to vector<8x1xf32>
    %72 = arith.truncf %69 : vector<8x16xf32> to vector<8x16xbf16>
    %cst_35 = arith.constant dense<0.000000e+00> : vector<8x8xf32>
    %73 = tpu.matmul %72, %63, %cst_35 {dimension_numbers = #tpu.dot_dimension_numbers<[1], [0], [0], [1], [0, 0, 1, 1], [], []>} : vector<8x16xbf16>, vector<16x8xbf16>, vector<8x8xf32> -> vector<8x8xf32>
    %74 = tpu.reciprocal %71 {approx = true} : vector<8x1xf32> -> vector<8x1xf32>
    %75 = vector.broadcast %74 : vector<8x1xf32> to vector<8x8xf32>
    %76 = arith.mulf %73, %75 : vector<8x8xf32>
    %77 = arith.truncf %76 : vector<8x8xf32> to vector<8x8xbf16>
    %c16_36 = arith.constant 16 : index
    %c0_37 = arith.constant 0 : index
    %78 = vector.load %arg8[%c16_36, %c0_37] : memref<32x32xbf16, #tpu.memory_space<vmem>>, vector<8x32xbf16>
    %cst_38 = arith.constant dense<0.000000e+00> : vector<8x32xf32>
    %79 = tpu.matmul %77, %78, %cst_38 {dimension_numbers = #tpu.dot_dimension_numbers<[1], [0], [0], [1], [0, 0, 1, 1], [], []>} : vector<8x8xbf16>, vector<8x32xbf16>, vector<8x32xf32> -> vector<8x32xf32>
    %80 = arith.addf %60, %79 : vector<8x32xf32>
    %81 = vector.extract_strided_slice %15 {offsets = [0, 24], sizes = [8, 8], strides = [1, 1]} : vector<8x32xbf16> to vector<8x8xbf16>
    %c0_39 = arith.constant 0 : index
    %c24 = arith.constant 24 : index
    %82 = vector.load %arg18[%c0_39, %c24] : memref<16x32xbf16, #tpu.memory_space<vmem>>, vector<16x8xbf16>
    %c0_40 = arith.constant 0 : index
    %c24_41 = arith.constant 24 : index
    %83 = vector.load %arg19[%c0_40, %c24_41] : memref<16x32xbf16, #tpu.memory_space<vmem>>, vector<16x8xbf16>
    %cst_42 = arith.constant dense<0.000000e+00> : vector<8x16xf32>
    %84 = tpu.matmul %81, %82, %cst_42 {dimension_numbers = #tpu.dot_dimension_numbers<[1], [1], [0], [0], [0, 0, 1, 0], [], []>} : vector<8x8xbf16>, vector<16x8xbf16>, vector<8x16xf32> -> vector<8x16xf32>
    %cst_43 = arith.constant dense<0xFF800000> : vector<8xf32>
    %85 = vector.multi_reduction <maximumf>, %84, %cst_43 [1] : vector<8x16xf32> to vector<8xf32>
    %86 = vector.shape_cast %85 : vector<8xf32> to vector<8x1xf32>
    %87 = vector.broadcast %86 : vector<8x1xf32> to vector<8x16xf32>
    %88 = arith.subf %84, %87 : vector<8x16xf32>
    %89 = math.exp %88 : vector<8x16xf32>
    %cst_44 = arith.constant dense<0.000000e+00> : vector<8xf32>
    %90 = vector.multi_reduction <add>, %89, %cst_44 [1] : vector<8x16xf32> to vector<8xf32>
    %91 = vector.shape_cast %90 : vector<8xf32> to vector<8x1xf32>
    %92 = arith.truncf %89 : vector<8x16xf32> to vector<8x16xbf16>
    %cst_45 = arith.constant dense<0.000000e+00> : vector<8x8xf32>
    %93 = tpu.matmul %92, %83, %cst_45 {dimension_numbers = #tpu.dot_dimension_numbers<[1], [0], [0], [1], [0, 0, 1, 1], [], []>} : vector<8x16xbf16>, vector<16x8xbf16>, vector<8x8xf32> -> vector<8x8xf32>
    %94 = tpu.reciprocal %91 {approx = true} : vector<8x1xf32> -> vector<8x1xf32>
    %95 = vector.broadcast %94 : vector<8x1xf32> to vector<8x8xf32>
    %96 = arith.mulf %93, %95 : vector<8x8xf32>
    %97 = arith.truncf %96 : vector<8x8xf32> to vector<8x8xbf16>
    %c24_46 = arith.constant 24 : index
    %c0_47 = arith.constant 0 : index
    %98 = vector.load %arg8[%c24_46, %c0_47] : memref<32x32xbf16, #tpu.memory_space<vmem>>, vector<8x32xbf16>
    %cst_48 = arith.constant dense<0.000000e+00> : vector<8x32xf32>
    %99 = tpu.matmul %97, %98, %cst_48 {dimension_numbers = #tpu.dot_dimension_numbers<[1], [0], [0], [1], [0, 0, 1, 1], [], []>} : vector<8x8xbf16>, vector<8x32xbf16>, vector<8x32xf32> -> vector<8x32xf32>
    %100 = arith.addf %80, %99 : vector<8x32xf32>
    %c0_49 = arith.constant 0 : index
    %c0_50 = arith.constant 0 : index
    %101 = vector.load %arg10[%c0_49, %c0_50] : memref<1x32xf32, #tpu.memory_space<vmem>>, vector<1x32xf32>
    %102 = vector.shape_cast %101 : vector<1x32xf32> to vector<32xf32>
    %c0_51 = arith.constant 0 : index
    %c0_52 = arith.constant 0 : index
    %103 = vector.load %arg11[%c0_51, %c0_52] : memref<1x32xf32, #tpu.memory_space<vmem>>, vector<1x32xf32>
    %104 = vector.shape_cast %103 : vector<1x32xf32> to vector<32xf32>
    %cst_53 = arith.constant dense<0.000000e+00> : vector<8xf32>
    %105 = vector.multi_reduction <add>, %100, %cst_53 [1] : vector<8x32xf32> to vector<8xf32>
    %106 = vector.shape_cast %105 : vector<8xf32> to vector<8x1xf32>
    %cst_54 = arith.constant 3.200000e+01 : f32
    %107 = vector.broadcast %cst_54 : f32 to vector<8x1xf32>
    %108 = arith.divf %106, %107 : vector<8x1xf32>
    %109 = vector.broadcast %108 : vector<8x1xf32> to vector<8x32xf32>
    %110 = arith.subf %100, %109 : vector<8x32xf32>
    %111 = arith.mulf %110, %110 : vector<8x32xf32>
    %cst_55 = arith.constant dense<0.000000e+00> : vector<8xf32>
    %112 = vector.multi_reduction <add>, %111, %cst_55 [1] : vector<8x32xf32> to vector<8xf32>
    %113 = vector.shape_cast %112 : vector<8xf32> to vector<8x1xf32>
    %cst_56 = arith.constant 3.200000e+01 : f32
    %114 = vector.broadcast %cst_56 : f32 to vector<8x1xf32>
    %115 = arith.divf %113, %114 : vector<8x1xf32>
    %116 = vector.broadcast %108 : vector<8x1xf32> to vector<8x32xf32>
    %117 = arith.subf %100, %116 : vector<8x32xf32>
    %cst_57 = arith.constant 9.99999974E-6 : f32
    %118 = vector.broadcast %cst_57 : f32 to vector<8x1xf32>
    %119 = arith.addf %115, %118 : vector<8x1xf32>
    %120 = math.rsqrt %119 : vector<8x1xf32>
    %121 = vector.broadcast %120 : vector<8x1xf32> to vector<8x32xf32>
    %122 = arith.mulf %117, %121 : vector<8x32xf32>
    %123 = vector.shape_cast %102 : vector<32xf32> to vector<1x32xf32>
    %124 = vector.broadcast %123 : vector<1x32xf32> to vector<8x32xf32>
    %125 = arith.mulf %122, %124 : vector<8x32xf32>
    %126 = vector.shape_cast %104 : vector<32xf32> to vector<1x32xf32>
    %127 = vector.broadcast %126 : vector<1x32xf32> to vector<8x32xf32>
    %128 = arith.addf %125, %127 : vector<8x32xf32>
    %129 = arith.truncf %128 : vector<8x32xf32> to vector<8x32xbf16>
    %c0_58 = arith.constant 0 : index
    %c0_59 = arith.constant 0 : index
    %130 = vector.load %arg12[%c0_58, %c0_59] : memref<32x64xbf16, #tpu.memory_space<vmem>>, vector<32x64xbf16>
    %cst_60 = arith.constant dense<0.000000e+00> : vector<8x64xf32>
    %131 = tpu.matmul %129, %130, %cst_60 {dimension_numbers = #tpu.dot_dimension_numbers<[1], [0], [0], [1], [0, 0, 1, 1], [], []>} : vector<8x32xbf16>, vector<32x64xbf16>, vector<8x64xf32> -> vector<8x64xf32>
    %c0_61 = arith.constant 0 : index
    %c0_62 = arith.constant 0 : index
    %132 = vector.load %arg13[%c0_61, %c0_62] : memref<1x64xf32, #tpu.memory_space<vmem>>, vector<1x64xf32>
    %133 = vector.shape_cast %132 : vector<1x64xf32> to vector<64xf32>
    %134 = vector.shape_cast %133 : vector<64xf32> to vector<1x64xf32>
    %135 = vector.broadcast %134 : vector<1x64xf32> to vector<8x64xf32>
    %136 = arith.addf %131, %135 : vector<8x64xf32>
    %cst_63 = arith.constant 5.000000e-01 : f32
    %137 = vector.broadcast %cst_63 : f32 to vector<8x64xf32>
    %138 = arith.mulf %137, %136 : vector<8x64xf32>
    %cst_64 = arith.constant 0.707106769 : f32
    %139 = vector.broadcast %cst_64 : f32 to vector<8x64xf32>
    %140 = arith.mulf %136, %139 : vector<8x64xf32>
    %141 = math.erf %140 : vector<8x64xf32>
    %cst_65 = arith.constant 1.000000e+00 : f32
    %142 = vector.broadcast %cst_65 : f32 to vector<8x64xf32>
    %143 = arith.addf %142, %141 : vector<8x64xf32>
    %144 = arith.mulf %138, %143 : vector<8x64xf32>
    %145 = arith.truncf %144 : vector<8x64xf32> to vector<8x64xbf16>
    %c0_66 = arith.constant 0 : index
    %c0_67 = arith.constant 0 : index
    %146 = vector.load %arg14[%c0_66, %c0_67] : memref<64x32xbf16, #tpu.memory_space<vmem>>, vector<64x32xbf16>
    %cst_68 = arith.constant dense<0.000000e+00> : vector<8x32xf32>
    %147 = tpu.matmul %145, %146, %cst_68 {dimension_numbers = #tpu.dot_dimension_numbers<[1], [0], [0], [1], [0, 0, 1, 1], [], []>} : vector<8x64xbf16>, vector<64x32xbf16>, vector<8x32xf32> -> vector<8x32xf32>
    %c0_69 = arith.constant 0 : index
    %c0_70 = arith.constant 0 : index
    %148 = vector.load %arg15[%c0_69, %c0_70] : memref<1x32xf32, #tpu.memory_space<vmem>>, vector<1x32xf32>
    %149 = vector.shape_cast %148 : vector<1x32xf32> to vector<32xf32>
    %150 = vector.shape_cast %149 : vector<32xf32> to vector<1x32xf32>
    %151 = vector.broadcast %150 : vector<1x32xf32> to vector<8x32xf32>
    %152 = arith.addf %147, %151 : vector<8x32xf32>
    %153 = arith.addf %152, %100 : vector<8x32xf32>
    %c0_71 = arith.constant 0 : index
    %c0_72 = arith.constant 0 : index
    %c0_73 = arith.constant 0 : index
    %154 = vector.load %arg16[%c0_71, %c0_72, %c0_73] : memref<1x8x32xf32, #tpu.memory_space<vmem>>, vector<1x8x32xf32>
    %155 = vector.shape_cast %154 : vector<1x8x32xf32> to vector<8x32xf32>
    %156 = vector.shape_cast %153 : vector<8x32xf32> to vector<1x8x32xf32>
    tpu.vector_store %arg16[%c0_71, %c0_72, %c0_73], %156 {strides = array<i32>} : memref<1x8x32xf32, #tpu.memory_space<vmem>>, vector<1x8x32xf32>,
    return
  }
  func.func @transform_0(%arg0: i32, %arg1: i32) -> (i32, i32, i32) {
    %c0_i32 = arith.constant 0 : i32
    %c0_i32_0 = arith.constant 0 : i32
    %c0_i32_1 = arith.constant 0 : i32
    return %arg0, %c0_i32, %c0_i32_0 : i32, i32, i32
  }
  func.func @transform_1(%arg0: i32, %arg1: i32) -> (i32, i32) {
    %c0_i32 = arith.constant 0 : i32
    %c0_i32_0 = arith.constant 0 : i32
    %c0_i32_1 = arith.constant 0 : i32
    return %c0_i32, %c0_i32_0 : i32, i32
  }
  func.func @transform_2(%arg0: i32, %arg1: i32) -> (i32, i32) {
    %c0_i32 = arith.constant 0 : i32
    %c0_i32_0 = arith.constant 0 : i32
    %c0_i32_1 = arith.constant 0 : i32
    return %c0_i32, %c0_i32_0 : i32, i32
  }
  func.func @transform_3(%arg0: i32, %arg1: i32) -> (i32, i32) {
    %c0_i32 = arith.constant 0 : i32
    %c0_i32_0 = arith.constant 0 : i32
    %c0_i32_1 = arith.constant 0 : i32
    return %c0_i32, %c0_i32_0 : i32, i32
  }
  func.func @transform_4(%arg0: i32, %arg1: i32) -> (i32, i32) {
    %c0_i32 = arith.constant 0 : i32
    %c0_i32_0 = arith.constant 0 : i32
    %c0_i32_1 = arith.constant 0 : i32
    return %c0_i32, %c0_i32_0 : i32, i32
  }
  func.func @transform_5(%arg0: i32, %arg1: i32) -> (i32, i32) {
    %c0_i32 = arith.constant 0 : i32
    %c0_i32_0 = arith.constant 0 : i32
    %c0_i32_1 = arith.constant 0 : i32
    return %c0_i32, %c0_i32_0 : i32, i32
  }
  func.func @transform_6(%arg0: i32, %arg1: i32) -> (i32, i32) {
    %c0_i32 = arith.constant 0 : i32
    %c0_i32_0 = arith.constant 0 : i32
    %c0_i32_1 = arith.constant 0 : i32
    return %c0_i32, %c0_i32_0 : i32, i32
  }
  func.func @transform_7(%arg0: i32, %arg1: i32) -> (i32, i32) {
    %c0_i32 = arith.constant 0 : i32
    %c0_i32_0 = arith.constant 0 : i32
    %c0_i32_1 = arith.constant 0 : i32
    return %c0_i32, %c0_i32_0 : i32, i32
  }
  func.func @transform_8(%arg0: i32, %arg1: i32) -> (i32, i32) {
    %c0_i32 = arith.constant 0 : i32
    %c0_i32_0 = arith.constant 0 : i32
    %c0_i32_1 = arith.constant 0 : i32
    return %c0_i32, %c0_i32_0 : i32, i32
  }
  func.func @transform_9(%arg0: i32, %arg1: i32) -> (i32, i32) {
    %c0_i32 = arith.constant 0 : i32
    %c0_i32_0 = arith.constant 0 : i32
    %c0_i32_1 = arith.constant 0 : i32
    return %c0_i32, %c0_i32_0 : i32, i32
  }
  func.func @transform_10(%arg0: i32, %arg1: i32) -> (i32, i32) {
    %c0_i32 = arith.constant 0 : i32
    %c0_i32_0 = arith.constant 0 : i32
    %c0_i32_1 = arith.constant 0 : i32
    return %c0_i32, %c0_i32_0 : i32, i32
  }
  func.func @transform_11(%arg0: i32, %arg1: i32) -> (i32, i32) {
    %c0_i32 = arith.constant 0 : i32
    %c0_i32_0 = arith.constant 0 : i32
    %c0_i32_1 = arith.constant 0 : i32
    return %c0_i32, %c0_i32_0 : i32, i32
  }
  func.func @transform_12(%arg0: i32, %arg1: i32) -> (i32, i32) {
    %c0_i32 = arith.constant 0 : i32
    %c0_i32_0 = arith.constant 0 : i32
    %c0_i32_1 = arith.constant 0 : i32
    return %c0_i32, %c0_i32_0 : i32, i32
  }
  func.func @transform_13(%arg0: i32, %arg1: i32) -> (i32, i32) {
    %c0_i32 = arith.constant 0 : i32
    %c0_i32_0 = arith.constant 0 : i32
    %c0_i32_1 = arith.constant 0 : i32
    return %c0_i32, %c0_i32_0 : i32, i32
  }
  func.func @transform_14(%arg0: i32, %arg1: i32) -> (i32, i32, i32) {
    %c0_i32 = arith.constant 0 : i32
    %c0_i32_0 = arith.constant 0 : i32
    return %arg0, %arg1, %c0_i32 : i32, i32, i32
  }
}

</mosaic_0001>

<llo_original>
// kernel: tpu_custom_call.1
$region0: #{tpu_custom_call.1}
  #allocation0 [shape = 'u32[]', space=smem, size = 0x4, offset = 0x4, fixed_abs, tag = 'smem constant byte address 0x4 - core index']
  #allocation1 [shape = 'u32[144,128]{1,0:T(1,128)}', space=vmem, size = 0x12000, scoped, tag = 'internal scratch']
  #allocation2 [shape = 'f32[16,32]{1,0:T(8,128)}', space=vmem, size = 0x2000, scoped, tag = 'scratch operand']
  #allocation3 [shape = 'bf16[16,32]{1,0:T(16,128)(2,1)}', space=vmem, size = 0x1000, scoped, tag = 'scratch operand']
  #allocation4 [shape = 'bf16[16,32]{1,0:T(16,128)(2,1)}', space=vmem, size = 0x1000, scoped, tag = 'scratch operand']
  %s0 = inlined_call_operand.vmem [shape: f32[2,16,32], index: 0, kind: input, shape index: {}]
  %s1 = inlined_call_operand.vmem [shape: f32[1,32], index: 1, kind: input, shape index: {}]
  %s2 = inlined_call_operand.vmem [shape: f32[1,32], index: 2, kind: input, shape index: {}]
  %s3 = inlined_call_operand.vmem [shape: bf16[32,32], index: 3, kind: input, shape index: {}]
  %s4 = inlined_call_operand.hbm [shape: bf16[32,32], index: 4, kind: input, shape index: {}]
  %s5 = inlined_call_operand.hbm [shape: bf16[32,32], index: 5, kind: input, shape index: {}]
  %s6 = inlined_call_operand.hbm [shape: bf16[32,32], index: 6, kind: input, shape index: {}]
  %s7 = inlined_call_operand.hbm [shape: f32[1,32], index: 7, kind: input, shape index: {}]
  %s8 = inlined_call_operand.hbm [shape: f32[1,32], index: 8, kind: input, shape index: {}]
  %s9 = inlined_call_operand.hbm [shape: f32[1,32], index: 9, kind: input, shape index: {}]
  %s10 = inlined_call_operand.vmem [shape: bf16[32,64], index: 10, kind: input, shape index: {}]
  %s11 = inlined_call_operand.vmem [shape: f32[1,64], index: 11, kind: input, shape index: {}]
  %s12 = inlined_call_operand.vmem [shape: bf16[64,32], index: 12, kind: input, shape index: {}]
  %s13 = inlined_call_operand.vmem [shape: f32[1,32], index: 13, kind: input, shape index: {}]
  %s14 = inlined_call_operand.hbm [shape: f32[2,16,32], index: 14, kind: output, shape index: {}]
  %s15 = sld [smem:[#allocation0]]
  $region117: #{tpu_custom_call.1} parent=0
    _
  %s17 = ssub.s32 1, %s15
  %s18 = scalar_select 0, %s17, %s15
  $region1: #{tpu_custom_call.1} parent=0
    #allocation5 [shape = 'u8[8192]{0}', space=vmem, size = 0x2000, scoped, tag = 'input window, operand 4, single buffered']
    #allocation6 [shape = 's32[2]{0}', space=sflag, size = 0x8, scoped, tag = 'scoped memory for tpu_custom_call.1']
    #allocation7 [shape = 's32[2]{0}', space=sflag, size = 0x8, scoped, tag = 'scoped memory for tpu_custom_call.1']
    #allocation8 [shape = 'u8[8192]{0}', space=vmem, size = 0x2000, scoped, tag = 'input window, operand 5, single buffered']
    #allocation9 [shape = 's32[1]{0}', space=sflag, size = 0x4, scoped, tag = 'scoped memory for tpu_custom_call.1']
    #allocation10 [shape = 'u8[8192]{0}', space=vmem, size = 0x2000, scoped, tag = 'input window, operand 6, single buffered']
    #allocation11 [shape = 'u8[512]{0}', space=vmem, size = 0x400, scoped, tag = 'input window, operand 7, single buffered']
    #allocation12 [shape = 's32[1]{0}', space=sflag, size = 0x4, scoped, tag = 'scoped memory for tpu_custom_call.1']
    #allocation13 [shape = 'u8[512]{0}', space=vmem, size = 0x400, scoped, tag = 'input window, operand 8, single buffered']
    #allocation14 [shape = 'u8[512]{0}', space=vmem, size = 0x400, scoped, tag = 'input window, operand 9, single buffered']
    #allocation15 [shape = 's32[1]{0}', space=sflag, size = 0x4, scoped, tag = 'scoped memory for tpu_custom_call.1']
    #allocation16 [shape = 'u8[8192]{0}', space=vmem, size = 0x2000, scoped, tag = 'output window, operand 0']
    %19 = vsyncpa [#allocation6], 0
    %20 = vsyncpa [#allocation9], 0
    %21 = vsyncpa [#allocation12], 0
    %22 = vsyncpa [#allocation15], 0
    %23 = vsyncpa [#allocation7], 0
    %s24 = scalar_lea.sflag [#allocation7], 1
    %25 = vsyncpa %s24, 0
    loop: start=0, step=1, limit=6
    $region2: #{tpu_custom_call.1} parent=1 // loop_pre_header
      _
    $region3: #{tpu_custom_call.1} parent=1 // loop_header
      %s27 = sphi 0, %s31
      %p28 = scmp.ge.s32.totalorder %s27, 6
      %s34 = sphi 0, %s46
      %s35 = sphi 0, %s42
      %s36 = sphi 0, %s34
      %s37 = sphi 0, %s35
      %s38 = sphi 0, %s36
      %s39 = sphi 0, %s37
      %s49 = sphi 0, %s51
      %s52 = sphi 0, %s49
      %s53 = sphi 0, %s52
      %s69 = sphi 0, %s53
      %s73 = sphi 0, %s73
      %s75 = sphi 0, %s73
      %s76 = sphi 0, %s75
      %s90 = sphi 0, %s76
      %s94 = sphi 0, %s94
      %s96 = sphi 0, %s94
      %s97 = sphi 0, %s96
      %s111 = sphi 0, %s97
      %s115 = sphi 0, %s115
      %s117 = sphi 0, %s115
      %s118 = sphi 0, %s117
      %s132 = sphi 0, %s118
      %s136 = sphi 0, %s136
      %s138 = sphi 0, %s136
      %s139 = sphi 0, %s138
      %s153 = sphi 0, %s139
      %s157 = sphi 0, %s157
      %s159 = sphi 0, %s157
      %s160 = sphi 0, %s159
      %s174 = sphi 0, %s160
      %s178 = sphi 0, %s178
      %s180 = sphi 0, %s178
      %s181 = sphi 0, %s180
      %s195 = sphi 0, %s181
      %s199 = sphi 0, %s199
      %s201 = sphi 0, %s199
      %s202 = sphi 0, %s201
      %s216 = sphi 0, %s202
      %s220 = sphi 0, %s220
      %s222 = sphi 0, %s220
      %s223 = sphi 0, %s222
      %s237 = sphi 0, %s223
      %s241 = sphi 0, %s241
      %s243 = sphi 0, %s241
      %s244 = sphi 0, %s243
      %s258 = sphi 0, %s244
      %s262 = sphi 0, %s262
      %s264 = sphi 0, %s262
      %s265 = sphi 0, %s264
      %s279 = sphi 0, %s265
      %s283 = sphi 0, %s283
      %s285 = sphi 0, %s283
      %s286 = sphi 0, %s285
      %s300 = sphi 0, %s286
      %s304 = sphi 0, %s304
      %s306 = sphi 0, %s304
      %s307 = sphi 0, %s306
      %s321 = sphi 0, %s307
      %s325 = sphi 0, %s325
      %s327 = sphi 0, %s325
      %s328 = sphi 0, %s327
      %s342 = sphi 0, %s328
      %s350 = sphi 0, %s352
      %s353 = sphi 0, %s350
      %s354 = sphi 0, %s353
      %s370 = sphi 0, %s354
    $region4: #{tpu_custom_call.1} parent=1 // loop_header_branch
      %30 = sbr.rel (%p28) target = $region8
    $region5: #{tpu_custom_call.1} parent=1 // loop_body
      %s32 = ssub.s32 %s27, 1
      %s33 = ssub.s32 %s27, 2
      %s40 = sadd.s32 1, %s35
      %p41 = scmp.ge.s32.totalorder %s40, 2
      %s42 = scalar_select %p41, 0, %s40
      %s43 = sadd.s32 1, %s34
      %s44 = scalar_select %p41, %s43, %s34
      %p45 = scmp.ge.s32.totalorder %s44, 2
      %s46 = scalar_select %p45, 0, %s44
      %s47 = ssub.s32 %s34, %s46
      %p48 = scmp.eq.s32.totalorder %s47, 0
      %s50 = sadd.s32 %s49, 1
      %s51 = scalar_select %p48, %s49, %s50
      %p54 = pneg %p48
      %p55 = scmp.eq.s32.totalorder %s27, 3
      %p56 = por %p54, %p55
      %p57 = scmp.ne.s32.totalorder %s49, %s52
      %p58 = scmp.eq.s32.totalorder %s27, 0
      %p59 = por %p57, %p58
      %p60 = scmp.ne.s32.totalorder %s49, %s52
      %p61 = scmp.eq.s32.totalorder %s32, 3
      %p62 = por %p60, %p61
      %p63 = scmp.ne.s32.totalorder %s52, %s53
      %p64 = scmp.eq.s32.totalorder %s32, 0
      %p65 = por %p63, %p64
      %p66 = scmp.ne.s32.totalorder %s52, %s53
      %p67 = scmp.eq.s32.totalorder %s33, 3
      %p68 = por %p66, %p67
      %p70 = scmp.ne.s32.totalorder %s53, %s69
      %p71 = scmp.eq.s32.totalorder %s33, 0
      %p72 = por %p70, %p71
      %s74 = sadd.s32 %s73, 1
      %p77 = scmp.eq.s32.totalorder %s27, 3
      %p78 = scmp.ne.s32.totalorder %s73, %s75
      %p79 = scmp.eq.s32.totalorder %s27, 0
      %p80 = por %p78, %p79
      %p81 = scmp.ne.s32.totalorder %s73, %s75
      %p82 = scmp.eq.s32.totalorder %s32, 3
      %p83 = por %p81, %p82
      %p84 = scmp.ne.s32.totalorder %s75, %s76
      %p85 = scmp.eq.s32.totalorder %s32, 0
      %p86 = por %p84, %p85
      %p87 = scmp.ne.s32.totalorder %s75, %s76
      %p88 = scmp.eq.s32.totalorder %s33, 3
      %p89 = por %p87, %p88
      %p91 = scmp.ne.s32.totalorder %s76, %s90
      %p92 = scmp.eq.s32.totalorder %s33, 0
      %p93 = por %p91, %p92
      %s95 = sadd.s32 %s94, 1
      %p98 = scmp.eq.s32.totalorder %s27, 3
      %p99 = scmp.ne.s32.totalorder %s94, %s96
      %p100 = scmp.eq.s32.totalorder %s27, 0
      %p101 = por %p99, %p100
      %p102 = scmp.ne.s32.totalorder %s94, %s96
      %p103 = scmp.eq.s32.totalorder %s32, 3
      %p104 = por %p102, %p103
      %p105 = scmp.ne.s32.totalorder %s96, %s97
      %p106 = scmp.eq.s32.totalorder %s32, 0
      %p107 = por %p105, %p106
      %p108 = scmp.ne.s32.totalorder %s96, %s97
      %p109 = scmp.eq.s32.totalorder %s33, 3
      %p110 = por %p108, %p109
      %p112 = scmp.ne.s32.totalorder %s97, %s111
      %p113 = scmp.eq.s32.totalorder %s33, 0
      %p114 = por %p112, %p113
      %s116 = sadd.s32 %s115, 1
      %p119 = scmp.eq.s32.totalorder %s27, 3
      %p120 = scmp.ne.s32.totalorder %s115, %s117
      %p121 = scmp.eq.s32.totalorder %s27, 0
      %p122 = por %p120, %p121
      %p123 = scmp.ne.s32.totalorder %s115, %s117
      %p124 = scmp.eq.s32.totalorder %s32, 3
      %p125 = por %p123, %p124
      %p126 = scmp.ne.s32.totalorder %s117, %s118
      %p127 = scmp.eq.s32.totalorder %s32, 0
      %p128 = por %p126, %p127
      %p129 = scmp.ne.s32.totalorder %s117, %s118
      %p130 = scmp.eq.s32.totalorder %s33, 3
      %p131 = por %p129, %p130
      %p133 = scmp.ne.s32.totalorder %s118, %s132
      %p134 = scmp.eq.s32.totalorder %s33, 0
      %p135 = por %p133, %p134
      %s137 = sadd.s32 %s136, 1
      %p140 = scmp.eq.s32.totalorder %s27, 3
      %p141 = scmp.ne.s32.totalorder %s136, %s138
      %p142 = scmp.eq.s32.totalorder %s27, 0
      %p143 = por %p141, %p142
      %p144 = scmp.ne.s32.totalorder %s136, %s138
      %p145 = scmp.eq.s32.totalorder %s32, 3
      %p146 = por %p144, %p145
      %p147 = scmp.ne.s32.totalorder %s138, %s139
      %p148 = scmp.eq.s32.totalorder %s32, 0
      %p149 = por %p147, %p148
      %p150 = scmp.ne.s32.totalorder %s138, %s139
      %p151 = scmp.eq.s32.totalorder %s33, 3
      %p152 = por %p150, %p151
      %p154 = scmp.ne.s32.totalorder %s139, %s153
      %p155 = scmp.eq.s32.totalorder %s33, 0
      %p156 = por %p154, %p155
      %s158 = sadd.s32 %s157, 1
      %p161 = scmp.eq.s32.totalorder %s27, 3
      %p162 = scmp.ne.s32.totalorder %s157, %s159
      %p163 = scmp.eq.s32.totalorder %s27, 0
      %p164 = por %p162, %p163
      %p165 = scmp.ne.s32.totalorder %s157, %s159
      %p166 = scmp.eq.s32.totalorder %s32, 3
      %p167 = por %p165, %p166
      %p168 = scmp.ne.s32.totalorder %s159, %s160
      %p169 = scmp.eq.s32.totalorder %s32, 0
      %p170 = por %p168, %p169
      %p171 = scmp.ne.s32.totalorder %s159, %s160
      %p172 = scmp.eq.s32.totalorder %s33, 3
      %p173 = por %p171, %p172
      %p175 = scmp.ne.s32.totalorder %s160, %s174
      %p176 = scmp.eq.s32.totalorder %s33, 0
      %p177 = por %p175, %p176
      %s179 = sadd.s32 %s178, 1
      %p182 = scmp.eq.s32.totalorder %s27, 3
      %p183 = scmp.ne.s32.totalorder %s178, %s180
      %p184 = scmp.eq.s32.totalorder %s27, 0
      %p185 = por %p183, %p184
      %p186 = scmp.ne.s32.totalorder %s178, %s180
      %p187 = scmp.eq.s32.totalorder %s32, 3
      %p188 = por %p186, %p187
      %p189 = scmp.ne.s32.totalorder %s180, %s181
      %p190 = scmp.eq.s32.totalorder %s32, 0
      %p191 = por %p189, %p190
      %p192 = scmp.ne.s32.totalorder %s180, %s181
      %p193 = scmp.eq.s32.totalorder %s33, 3
      %p194 = por %p192, %p193
      %p196 = scmp.ne.s32.totalorder %s181, %s195
      %p197 = scmp.eq.s32.totalorder %s33, 0
      %p198 = por %p196, %p197
      %s200 = sadd.s32 %s199, 1
      %p203 = scmp.eq.s32.totalorder %s27, 3
      %p204 = scmp.ne.s32.totalorder %s199, %s201
      %p205 = scmp.eq.s32.totalorder %s27, 0
      %p206 = por %p204, %p205
      %p207 = scmp.ne.s32.totalorder %s199, %s201
      %p208 = scmp.eq.s32.totalorder %s32, 3
      %p209 = por %p207, %p208
      %p210 = scmp.ne.s32.totalorder %s201, %s202
      %p211 = scmp.eq.s32.totalorder %s32, 0
      %p212 = por %p210, %p211
      %p213 = scmp.ne.s32.totalorder %s201, %s202
      %p214 = scmp.eq.s32.totalorder %s33, 3
      %p215 = por %p213, %p214
      %p217 = scmp.ne.s32.totalorder %s202, %s216
      %p218 = scmp.eq.s32.totalorder %s33, 0
      %p219 = por %p217, %p218
      %s221 = sadd.s32 %s220, 1
      %p224 = scmp.eq.s32.totalorder %s27, 3
      %p225 = scmp.ne.s32.totalorder %s220, %s222
      %p226 = scmp.eq.s32.totalorder %s27, 0
      %p227 = por %p225, %p226
      %p228 = scmp.ne.s32.totalorder %s220, %s222
      %p229 = scmp.eq.s32.totalorder %s32, 3
      %p230 = por %p228, %p229
      %p231 = scmp.ne.s32.totalorder %s222, %s223
      %p232 = scmp.eq.s32.totalorder %s32, 0
      %p233 = por %p231, %p232
      %p234 = scmp.ne.s32.totalorder %s222, %s223
      %p235 = scmp.eq.s32.totalorder %s33, 3
      %p236 = por %p234, %p235
      %p238 = scmp.ne.s32.totalorder %s223, %s237
      %p239 = scmp.eq.s32.totalorder %s33, 0
      %p240 = por %p238, %p239
      %s242 = sadd.s32 %s241, 1
      %p245 = scmp.eq.s32.totalorder %s27, 3
      %p246 = scmp.ne.s32.totalorder %s241, %s243
      %p247 = scmp.eq.s32.totalorder %s27, 0
      %p248 = por %p246, %p247
      %p249 = scmp.ne.s32.totalorder %s241, %s243
      %p250 = scmp.eq.s32.totalorder %s32, 3
      %p251 = por %p249, %p250
      %p252 = scmp.ne.s32.totalorder %s243, %s244
      %p253 = scmp.eq.s32.totalorder %s32, 0
      %p254 = por %p252, %p253
      %p255 = scmp.ne.s32.totalorder %s243, %s244
      %p256 = scmp.eq.s32.totalorder %s33, 3
      %p257 = por %p255, %p256
      %p259 = scmp.ne.s32.totalorder %s244, %s258
      %p260 = scmp.eq.s32.totalorder %s33, 0
      %p261 = por %p259, %p260
      %s263 = sadd.s32 %s262, 1
      %p266 = scmp.eq.s32.totalorder %s27, 3
      %p267 = scmp.ne.s32.totalorder %s262, %s264
      %p268 = scmp.eq.s32.totalorder %s27, 0
      %p269 = por %p267, %p268
      %p270 = scmp.ne.s32.totalorder %s262, %s264
      %p271 = scmp.eq.s32.totalorder %s32, 3
      %p272 = por %p270, %p271
      %p273 = scmp.ne.s32.totalorder %s264, %s265
      %p274 = scmp.eq.s32.totalorder %s32, 0
      %p275 = por %p273, %p274
      %p276 = scmp.ne.s32.totalorder %s264, %s265
      %p277 = scmp.eq.s32.totalorder %s33, 3
      %p278 = por %p276, %p277
      %p280 = scmp.ne.s32.totalorder %s265, %s279
      %p281 = scmp.eq.s32.totalorder %s33, 0
      %p282 = por %p280, %p281
      %s284 = sadd.s32 %s283, 1
      %p287 = scmp.eq.s32.totalorder %s27, 3
      %p288 = scmp.ne.s32.totalorder %s283, %s285
      %p289 = scmp.eq.s32.totalorder %s27, 0
      %p290 = por %p288, %p289
      %p291 = scmp.ne.s32.totalorder %s283, %s285
      %p292 = scmp.eq.s32.totalorder %s32, 3
      %p293 = por %p291, %p292
      %p294 = scmp.ne.s32.totalorder %s285, %s286
      %p295 = scmp.eq.s32.totalorder %s32, 0
      %p296 = por %p294, %p295
      %p297 = scmp.ne.s32.totalorder %s285, %s286
      %p298 = scmp.eq.s32.totalorder %s33, 3
      %p299 = por %p297, %p298
      %p301 = scmp.ne.s32.totalorder %s286, %s300
      %p302 = scmp.eq.s32.totalorder %s33, 0
      %p303 = por %p301, %p302
      %s305 = sadd.s32 %s304, 1
      %p308 = scmp.eq.s32.totalorder %s27, 3
      %p309 = scmp.ne.s32.totalorder %s304, %s306
      %p310 = scmp.eq.s32.totalorder %s27, 0
      %p311 = por %p309, %p310
      %p312 = scmp.ne.s32.totalorder %s304, %s306
      %p313 = scmp.eq.s32.totalorder %s32, 3
      %p314 = por %p312, %p313
      %p315 = scmp.ne.s32.totalorder %s306, %s307
      %p316 = scmp.eq.s32.totalorder %s32, 0
      %p317 = por %p315, %p316
      %p318 = scmp.ne.s32.totalorder %s306, %s307
      %p319 = scmp.eq.s32.totalorder %s33, 3
      %p320 = por %p318, %p319
      %p322 = scmp.ne.s32.totalorder %s307, %s321
      %p323 = scmp.eq.s32.totalorder %s33, 0
      %p324 = por %p322, %p323
      %s326 = sadd.s32 %s325, 1
      %p329 = scmp.eq.s32.totalorder %s27, 3
      %p330 = scmp.ne.s32.totalorder %s325, %s327
      %p331 = scmp.eq.s32.totalorder %s27, 0
      %p332 = por %p330, %p331
      %p333 = scmp.ne.s32.totalorder %s325, %s327
      %p334 = scmp.eq.s32.totalorder %s32, 3
      %p335 = por %p333, %p334
      %p336 = scmp.ne.s32.totalorder %s327, %s328
      %p337 = scmp.eq.s32.totalorder %s32, 0
      %p338 = por %p336, %p337
      %p339 = scmp.ne.s32.totalorder %s327, %s328
      %p340 = scmp.eq.s32.totalorder %s33, 3
      %p341 = por %p339, %p340
      %p343 = scmp.ne.s32.totalorder %s328, %s342
      %p344 = scmp.eq.s32.totalorder %s33, 0
      %p345 = por %p343, %p344
      %s346 = ssub.s32 %s34, %s46
      %s347 = ssub.s32 %s35, %s42
      %s348 = sor.u32 %s346, %s347
      %p349 = scmp.eq.s32.totalorder %s348, 0
      %s351 = sadd.s32 %s350, 1
      %s352 = scalar_select %p349, %s350, %s351
      %p355 = pneg %p349
      %p356 = scmp.eq.s32.totalorder %s27, 3
      %p357 = por %p355, %p356
      %p358 = scmp.ne.s32.totalorder %s350, %s353
      %p359 = scmp.eq.s32.totalorder %s27, 0
      %p360 = por %p358, %p359
      %p361 = scmp.ne.s32.totalorder %s350, %s353
      %p362 = scmp.eq.s32.totalorder %s32, 3
      %p363 = por %p361, %p362
      %p364 = scmp.ne.s32.totalorder %s353, %s354
      %p365 = scmp.eq.s32.totalorder %s32, 0
      %p366 = por %p364, %p365
      %p367 = scmp.ne.s32.totalorder %s353, %s354
      %p368 = scmp.eq.s32.totalorder %s33, 3
      %p369 = por %p367, %p368
      %p371 = scmp.ne.s32.totalorder %s354, %s370
      %p372 = scmp.eq.s32.totalorder %s33, 0
      %p373 = por %p371, %p372
      %p374 = scmp.le.s32.totalorder 1, %s27
      %p375 = scmp.lt.s32.totalorder %s27, 5
      %p376 = pnand %p374, %p375
      %p377 = pneg %p376
      // Predicated region
      $region9: #{tpu_custom_call.1} parent=5 // pred_check
        _
      $region10: #{tpu_custom_call.1} parent=5 // pred_check_branch
        %379 = sbr.rel (%p376) target = $region12
      $region11: #{tpu_custom_call.1} parent=5 // pred_region
        %s380 = ssub.s32 %s27, 1
        // Predicated region
        $region13: #{tpu_custom_call.1} parent=11 // pred_check
          %p381 = pneg %p86
        $region14: #{tpu_custom_call.1} parent=11 // pred_check_branch
          %383 = sbr.rel (%p381) target = $region16
        $region15: #{tpu_custom_call.1} parent=11 // pred_region
          _
        $region16: #{tpu_custom_call.1} parent=11 // pred_fallthru
          _
        // Predicated region
        $region17: #{tpu_custom_call.1} parent=11 // pred_check
          %p384 = pneg %p107
        $region18: #{tpu_custom_call.1} parent=11 // pred_check_branch
          %386 = sbr.rel (%p384) target = $region20
        $region19: #{tpu_custom_call.1} parent=11 // pred_region
          _
        $region20: #{tpu_custom_call.1} parent=11 // pred_fallthru
          _
        // Predicated region
        $region21: #{tpu_custom_call.1} parent=11 // pred_check
          %p387 = pneg %p128
        $region22: #{tpu_custom_call.1} parent=11 // pred_check_branch
          %389 = sbr.rel (%p387) target = $region24
        $region23: #{tpu_custom_call.1} parent=11 // pred_region
          _
        $region24: #{tpu_custom_call.1} parent=11 // pred_fallthru
          _
        // Predicated region
        $region25: #{tpu_custom_call.1} parent=11 // pred_check
          %p390 = pneg %p149
        $region26: #{tpu_custom_call.1} parent=11 // pred_check_branch
          %392 = sbr.rel (%p390) target = $region28
        $region27: #{tpu_custom_call.1} parent=11 // pred_region
          %s394 = ssub.s32 256, 256
          %395 = vsyncadd [#allocation6], %s394
          %s396 = sshll.u32 [#allocation5], 4
          %s397 = int_to_ptr.vmem [resolvable:$true] %s396
          %402 = dma.hbm_to_vmem [thread:$0]  %s4, 256, %s397, [#allocation6], 64, 64, 4
        $region28: #{tpu_custom_call.1} parent=11 // pred_fallthru
          _
        // Predicated region
        $region29: #{tpu_custom_call.1} parent=11 // pred_check
          %p403 = pneg %p170
        $region30: #{tpu_custom_call.1} parent=11 // pred_check_branch
          %405 = sbr.rel (%p403) target = $region32
        $region31: #{tpu_custom_call.1} parent=11 // pred_region
          %s407 = ssub.s32 256, 256
          %408 = vsyncadd [#allocation9], %s407
          %s409 = sshll.u32 [#allocation8], 4
          %s410 = int_to_ptr.vmem [resolvable:$true] %s409
          %415 = dma.hbm_to_vmem [thread:$0]  %s5, 256, %s410, [#allocation9], 64, 64, 4
        $region32: #{tpu_custom_call.1} parent=11 // pred_fallthru
          _
        // Predicated region
        $region33: #{tpu_custom_call.1} parent=11 // pred_check
          %p416 = pneg %p191
        $region34: #{tpu_custom_call.1} parent=11 // pred_check_branch
          %418 = sbr.rel (%p416) target = $region36
        $region35: #{tpu_custom_call.1} parent=11 // pred_region
          %s420 = ssub.s32 256, 256
          %421 = vsyncadd [#allocation9], %s420
          %s422 = sshll.u32 [#allocation10], 4
          %s423 = int_to_ptr.vmem [resolvable:$true] %s422
          %428 = dma.hbm_to_vmem [thread:$0]  %s6, 256, %s423, [#allocation9], 64, 64, 4
        $region36: #{tpu_custom_call.1} parent=11 // pred_fallthru
          _
        // Predicated region
        $region37: #{tpu_custom_call.1} parent=11 // pred_check
          %p429 = pneg %p212
        $region38: #{tpu_custom_call.1} parent=11 // pred_check_branch
          %431 = sbr.rel (%p429) target = $region40
        $region39: #{tpu_custom_call.1} parent=11 // pred_region
          %s433 = ssub.s32 16, 16
          %434 = vsyncadd [#allocation12], %s433
          %s436 = sshll.u32 [#allocation11], 4
          %s437 = int_to_ptr.vmem [resolvable:$true] %s436
          %439 = dma.hbm_to_vmem [thread:$0]  %s7, 16, %s437, [#allocation12]
        $region40: #{tpu_custom_call.1} parent=11 // pred_fallthru
          _
        // Predicated region
        $region41: #{tpu_custom_call.1} parent=11 // pred_check
          %p440 = pneg %p233
        $region42: #{tpu_custom_call.1} parent=11 // pred_check_branch
          %442 = sbr.rel (%p440) target = $region44
        $region43: #{tpu_custom_call.1} parent=11 // pred_region
          %s444 = ssub.s32 16, 16
          %445 = vsyncadd [#allocation12], %s444
          %s447 = sshll.u32 [#allocation13], 4
          %s448 = int_to_ptr.vmem [resolvable:$true] %s447
          %450 = dma.hbm_to_vmem [thread:$0]  %s8, 16, %s448, [#allocation12]
        $region44: #{tpu_custom_call.1} parent=11 // pred_fallthru
          _
        // Predicated region
        $region45: #{tpu_custom_call.1} parent=11 // pred_check
          %p451 = pneg %p254
        $region46: #{tpu_custom_call.1} parent=11 // pred_check_branch
          %453 = sbr.rel (%p451) target = $region48
        $region47: #{tpu_custom_call.1} parent=11 // pred_region
          %s455 = ssub.s32 16, 16
          %456 = vsyncadd [#allocation15], %s455
          %s458 = sshll.u32 [#allocation14], 4
          %s459 = int_to_ptr.vmem [resolvable:$true] %s458
          %461 = dma.hbm_to_vmem [thread:$0]  %s9, 16, %s459, [#allocation15]
        $region48: #{tpu_custom_call.1} parent=11 // pred_fallthru
          _
        // Predicated region
        $region49: #{tpu_custom_call.1} parent=11 // pred_check
          %p462 = pneg %p275
        $region50: #{tpu_custom_call.1} parent=11 // pred_check_branch
          %464 = sbr.rel (%p462) target = $region52
        $region51: #{tpu_custom_call.1} parent=11 // pred_region
          _
        $region52: #{tpu_custom_call.1} parent=11 // pred_fallthru
          _
        // Predicated region
        $region53: #{tpu_custom_call.1} parent=11 // pred_check
          %p465 = pneg %p296
        $region54: #{tpu_custom_call.1} parent=11 // pred_check_branch
          %467 = sbr.rel (%p465) target = $region56
        $region55: #{tpu_custom_call.1} parent=11 // pred_region
          _
        $region56: #{tpu_custom_call.1} parent=11 // pred_fallthru
          _
        // Predicated region
        $region57: #{tpu_custom_call.1} parent=11 // pred_check
          %p468 = pneg %p317
        $region58: #{tpu_custom_call.1} parent=11 // pred_check_branch
          %470 = sbr.rel (%p468) target = $region60
        $region59: #{tpu_custom_call.1} parent=11 // pred_region
          _
        $region60: #{tpu_custom_call.1} parent=11 // pred_fallthru
          _
        // Predicated region
        $region61: #{tpu_custom_call.1} parent=11 // pred_check
          %p471 = pneg %p338
        $region62: #{tpu_custom_call.1} parent=11 // pred_check_branch
          %473 = sbr.rel (%p471) target = $region64
        $region63: #{tpu_custom_call.1} parent=11 // pred_region
          _
        $region64: #{tpu_custom_call.1} parent=11 // pred_fallthru
          _
      $region12: #{tpu_custom_call.1} parent=5 // pred_fallthru
        _
      %p474 = scmp.lt.s32.totalorder %s27, 4
      // Predicated region
      $region65: #{tpu_custom_call.1} parent=5 // pred_check
        %p475 = pneg %p474
      $region66: #{tpu_custom_call.1} parent=5 // pred_check_branch
        %477 = sbr.rel (%p475) target = $region68
      $region67: #{tpu_custom_call.1} parent=5 // pred_region
        // Predicated region
        $region69: #{tpu_custom_call.1} parent=67 // pred_check
          %p478 = pneg %p59
        $region70: #{tpu_custom_call.1} parent=67 // pred_check_branch
          %480 = sbr.rel (%p478) target = $region72
        $region71: #{tpu_custom_call.1} parent=67 // pred_region
          %p481 = scmp.lt.s32.totalorder %s34, 1
          %s482 = scalar_select %p481, %s34, 1
          %s483 = smul.addr %s482, 2
          %s484 = smul.addr %s483, 8
          %s485 = scalar_lea.vmem %s0, %s484
        $region72: #{tpu_custom_call.1} parent=67 // pred_fallthru
          _
      $region68: #{tpu_custom_call.1} parent=5 // pred_fallthru
        _
      %p486 = scmp.le.s32.totalorder 1, %s27
      %p487 = scmp.lt.s32.totalorder %s27, 5
      %p488 = pnand %p486, %p487
      %p489 = pneg %p488
      // Predicated region
      $region73: #{tpu_custom_call.1} parent=5 // pred_check
        _
      $region74: #{tpu_custom_call.1} parent=5 // pred_check_branch
        %491 = sbr.rel (%p488) target = $region76
      $region75: #{tpu_custom_call.1} parent=5 // pred_region
        %s492 = ssub.s32 %s27, 1
        // Predicated region
        $region77: #{tpu_custom_call.1} parent=75 // pred_check
          %p493 = pneg %p149
        $region78: #{tpu_custom_call.1} parent=75 // pred_check_branch
          %495 = sbr.rel (%p493) target = $region80
        $region79: #{tpu_custom_call.1} parent=75 // pred_region
          %496 = dma.done [#allocation6], 256
        $region80: #{tpu_custom_call.1} parent=75 // pred_fallthru
          _
        // Predicated region
        $region81: #{tpu_custom_call.1} parent=75 // pred_check
          %p497 = pneg %p170
        $region82: #{tpu_custom_call.1} parent=75 // pred_check_branch
          %499 = sbr.rel (%p497) target = $region84
        $region83: #{tpu_custom_call.1} parent=75 // pred_region
          %500 = dma.done [#allocation9], 256
        $region84: #{tpu_custom_call.1} parent=75 // pred_fallthru
          _
        // Predicated region
        $region85: #{tpu_custom_call.1} parent=75 // pred_check
          %p501 = pneg %p191
        $region86: #{tpu_custom_call.1} parent=75 // pred_check_branch
          %503 = sbr.rel (%p501) target = $region88
        $region87: #{tpu_custom_call.1} parent=75 // pred_region
          %504 = dma.done [#allocation9], 256
        $region88: #{tpu_custom_call.1} parent=75 // pred_fallthru
          _
        // Predicated region
        $region89: #{tpu_custom_call.1} parent=75 // pred_check
          %p505 = pneg %p212
        $region90: #{tpu_custom_call.1} parent=75 // pred_check_branch
          %507 = sbr.rel (%p505) target = $region92
        $region91: #{tpu_custom_call.1} parent=75 // pred_region
          %508 = dma.done [#allocation12], 16
        $region92: #{tpu_custom_call.1} parent=75 // pred_fallthru
          _
        // Predicated region
        $region93: #{tpu_custom_call.1} parent=75 // pred_check
          %p509 = pneg %p233
        $region94: #{tpu_custom_call.1} parent=75 // pred_check_branch
          %511 = sbr.rel (%p509) target = $region96
        $region95: #{tpu_custom_call.1} parent=75 // pred_region
          %512 = dma.done [#allocation12], 16
        $region96: #{tpu_custom_call.1} parent=75 // pred_fallthru
          _
        // Predicated region
        $region97: #{tpu_custom_call.1} parent=75 // pred_check
          %p513 = pneg %p254
        $region98: #{tpu_custom_call.1} parent=75 // pred_check_branch
          %515 = sbr.rel (%p513) target = $region100
        $region99: #{tpu_custom_call.1} parent=75 // pred_region
          %516 = dma.done [#allocation15], 16
        $region100: #{tpu_custom_call.1} parent=75 // pred_fallthru
          _
        %p517 = scmp.lt.s32.totalorder %s36, 1
        %s518 = scalar_select %p517, %s36, 1
        %s519 = smul.addr %s518, 2
        %s520 = smul.addr %s519, 8
        %s521 = scalar_lea.vmem %s0, %s520
        %p522 = pneg %p65
        %p523 = pneg %p62
        %p524 = pneg %p86
        %p525 = pneg %p83
        %p526 = pneg %p107
        %p527 = pneg %p104
        %p528 = pneg %p128
        %p529 = pneg %p125
        %p530 = pneg %p149
        %p531 = pneg %p146
        %p532 = pneg %p170
        %p533 = pneg %p167
        %p534 = pneg %p191
        %p535 = pneg %p188
        %p536 = pneg %p212
        %p537 = pneg %p209
        %p538 = pneg %p233
        %p539 = pneg %p230
        %p540 = pneg %p254
        %p541 = pneg %p251
        %p542 = pneg %p275
        %p543 = pneg %p272
        %p544 = pneg %p296
        %p545 = pneg %p293
        %p546 = pneg %p317
        %p547 = pneg %p314
        %p548 = pneg %p338
        %p549 = pneg %p335
        %p550 = pneg %p366
        %p551 = pneg %p363
        %s552 = sand.u32 %s353, 1
        %s553 = scalar_lea.sflag [#allocation7], %s552
        %s554 = sand.u32 %s353, 1
        %s555 = smul.addr %s554, 8
        %s556 = scalar_lea.vmem [#allocation16], %s555
        %p557 = scmp.lt.s32.totalorder %s36, 1
        %s558 = scalar_select %p557, %s36, 1
        %s559 = smul.addr %s558, 2
        %s560 = smul.addr %s559, 8
        %s561 = scalar_lea.vmem %s0, %s560
        %s563 = smul.u32 %s37, 8
        %p564 = scmp.eq.s32.totalorder %s37, 0
        // Predicated region
        $region101: #{tpu_custom_call.1} parent=75 // pred_check
          %p565 = pneg %p564
        $region102: #{tpu_custom_call.1} parent=75 // pred_check_branch
          %567 = sbr.rel (%p565) target = $region104
        $region103: #{tpu_custom_call.1} parent=75 // pred_region
          %v568 = vld [vmem:[%s561] sm:$0xff]
          %v569 = vld [vmem:[%s561 + $0x8] sm:$0xff]
          %v570 = vld [vmem:[%s1] sm:$0x1]
          %v571 = vld [vmem:[%s2] sm:$0x1]
          %vm572 = vcmask 261120
          %v573 = vsel %vm572, %v568, 0.0
          %574 = vadd.xlane.f32.xlu0 %v573
          %v575 = vpop.xlane.xlu0 %574
          %v576 = vsel %vm572, %v569, 0.0
          %577 = vadd.xlane.f32.xlu0 %v576
          %v578 = vpop.xlane.xlu0 %577
          %v579 = vrcp.pop 32.0
          %v580 = vmul.f32 %v575, %v579
          %v581 = vmul.f32 %v578, %v579
          %v582 = vsub.f32 %v568, %v580
          %v583 = vsub.f32 %v569, %v581
          %v584 = vmul.f32 %v582, %v582
          %v585 = vmul.f32 %v583, %v583
          %v586 = vsel %vm572, %v584, 0.0
          %587 = vadd.xlane.f32.xlu0 %v586
          %v588 = vpop.xlane.xlu0 %587
          %v589 = vsel %vm572, %v585, 0.0
          %590 = vadd.xlane.f32.xlu0 %v589
          %v591 = vpop.xlane.xlu0 %590
          %v592 = vmul.f32 %v588, %v579
          %v593 = vmul.f32 %v591, %v579
          %v594 = vadd.f32 %v592, 1e-05
          %v595 = vadd.f32 %v593, 1e-05
          %v596 = vrsqrt.pop %v594
          %v597 = vrsqrt.pop %v595
          %v598 = vmul.f32 %v582, %v596
          %v599 = vmul.f32 %v583, %v597
          %v601 = vlaneseq
          %v602 = vshrl.u32 %v601, 7
          %v603 = vsub.s32 0, %v602
          %v604 = vrot.slane %v570, %v603
          %v606 = vmul.f32 %v598, %v604
          %v607 = vmul.f32 %v599, %v604
          %v609 = vlaneseq
          %v610 = vshrl.u32 %v609, 7
          %v611 = vsub.s32 0, %v610
          %v612 = vrot.slane %v571, %v611
          %v614 = vadd.f32 %v606, %v612
          %v615 = vadd.f32 %v607, %v612
          %616 = vst.msk [vmem:[#allocation2] sm:$0xff] %vm572, %v614
          %617 = vst.msk [vmem:[#allocation2 + $0x8] sm:$0xff] %vm572, %v615
          %v618 = vpack.c.bf16 %v615, %v614
          %v619 = vld [vmem:[#allocation5] sm:$0xf]
          %v620 = vld [vmem:[#allocation5 + $0x4] sm:$0xf]
          %v621 = vld [vmem:[#allocation5 + $0x8] sm:$0xf]
          %v622 = vld [vmem:[#allocation5 + $0xc] sm:$0xf]
          %v627 = vunpack.c.l.b16 %v619
          %v628 = vunpack.c.l.b16 %v620
          %v629 = vunpack.c.l.b16 %v621
          %v630 = vunpack.c.l.b16 %v622
          %v631 = vpack.c.b16 %v628, %v627
          %v632 = vpack.c.b16 %v630, %v629
          %v636 = vsel %vm572, %v618, 0
          %638 = vmatprep.subr.bf16.mxu0 0
          %639 = vmatpush1.bf16.msra.mxu0 %v631
          %640 = vmatprep.subr.bf16.mxu0 0
          %641 = vmatpush1.bf16.msra.mxu0 %v632
          %642 = vmatprep.subr.bf16.mxu0 0
          %643 = vmatpush1.bf16.msra.mxu0 0
          %644 = vmatprep.subr.bf16.mxu0 0
          %645 = vmatpush1.bf16.msra.mxu0 0
          %646 = vmatprep.subr.bf16.mxu0 0
          %647 = vmatpush1.bf16.msra.mxu0 0
          %648 = vmatprep.subr.bf16.mxu0 0
          %649 = vmatpush1.bf16.msra.mxu0 0
          %650 = vmatprep.subr.bf16.mxu0 0
          %651 = vmatpush1.bf16.msra.mxu0 0
          %652 = vmatprep.subr.bf16.mxu0 0
          %653 = vmatpush1.bf16.msra.mxu0 0
          %654 = vmatprep.subr.bf16.mxu0 0
          %655 = vmatpush1.bf16.msra.mxu0 0
          %656 = vmatprep.subr.bf16.mxu0 0
          %657 = vmatpush1.bf16.msra.mxu0 0
          %658 = vmatprep.subr.bf16.mxu0 0
          %659 = vmatpush1.bf16.msra.mxu0 0
          %660 = vmatprep.subr.bf16.mxu0 0
          %661 = vmatpush1.bf16.msra.mxu0 0
          %662 = vmatprep.subr.bf16.mxu0 0
          %663 = vmatpush1.bf16.msra.mxu0 0
          %664 = vmatprep.subr.bf16.mxu0 0
          %665 = vmatpush1.bf16.msra.mxu0 0
          %666 = vmatprep.subr.bf16.mxu0 0
          %667 = vmatpush1.bf16.msra.mxu0 0
          %668 = vmatprep.subr.bf16.mxu0 0
          %669 = vmatpush1.bf16.msra.mxu0 0
          %670 = vmatprep.mubr.bf16.mxu0 0
          %671 = vmatmul.mubr.bf16.gmra.mrb[0].mxu0 %v636
          %v672 = vpop.f32.mrb[0].mxu0
          %v673 = vadd.f32 0.0, %v672
          %v674 = vpop.f32.mrb[0].mxu0
          %v675 = vpop.f32.mrb[0].mxu0
          %v676 = vadd.f32 0.0, %v675
          %v677 = vpop.f32.mrb[0].mxu0
          %678 = vdwg.mxu0
          %v679 = vpack.c.bf16 %v676, %v673
          %680 = vst.msk [vmem:[#allocation3] sm:$0xff] %vm572, %v679
          %v681 = vld [vmem:[#allocation8] sm:$0xf]
          %v682 = vld [vmem:[#allocation8 + $0x4] sm:$0xf]
          %v683 = vld [vmem:[#allocation8 + $0x8] sm:$0xf]
          %v684 = vld [vmem:[#allocation8 + $0xc] sm:$0xf]
          %v689 = vunpack.c.l.b16 %v681
          %v690 = vunpack.c.l.b16 %v682
          %v691 = vunpack.c.l.b16 %v683
          %v692 = vunpack.c.l.b16 %v684
          %v693 = vpack.c.b16 %v690, %v689
          %v694 = vpack.c.b16 %v692, %v691
          %697 = vmatprep.subr.bf16.mxu0 0
          %698 = vmatpush1.bf16.msra.mxu0 %v693
          %699 = vmatprep.subr.bf16.mxu0 0
          %700 = vmatpush1.bf16.msra.mxu0 %v694
          %701 = vmatprep.subr.bf16.mxu0 0
          %702 = vmatpush1.bf16.msra.mxu0 0
          %703 = vmatprep.subr.bf16.mxu0 0
          %704 = vmatpush1.bf16.msra.mxu0 0
          %705 = vmatprep.subr.bf16.mxu0 0
          %706 = vmatpush1.bf16.msra.mxu0 0
          %707 = vmatprep.subr.bf16.mxu0 0
          %708 = vmatpush1.bf16.msra.mxu0 0
          %709 = vmatprep.subr.bf16.mxu0 0
          %710 = vmatpush1.bf16.msra.mxu0 0
          %711 = vmatprep.subr.bf16.mxu0 0
          %712 = vmatpush1.bf16.msra.mxu0 0
          %713 = vmatprep.subr.bf16.mxu0 0
          %714 = vmatpush1.bf16.msra.mxu0 0
          %715 = vmatprep.subr.bf16.mxu0 0
          %716 = vmatpush1.bf16.msra.mxu0 0
          %717 = vmatprep.subr.bf16.mxu0 0
          %718 = vmatpush1.bf16.msra.mxu0 0
          %719 = vmatprep.subr.bf16.mxu0 0
          %720 = vmatpush1.bf16.msra.mxu0 0
          %721 = vmatprep.subr.bf16.mxu0 0
          %722 = vmatpush1.bf16.msra.mxu0 0
          %723 = vmatprep.subr.bf16.mxu0 0
          %724 = vmatpush1.bf16.msra.mxu0 0
          %725 = vmatprep.subr.bf16.mxu0 0
          %726 = vmatpush1.bf16.msra.mxu0 0
          %727 = vmatprep.subr.bf16.mxu0 0
          %728 = vmatpush1.bf16.msra.mxu0 0
          %729 = vmatprep.mubr.bf16.mxu0 0
          %730 = vmatmul.mubr.bf16.gmra.mrb[0].mxu0 %v636
          %v731 = vpop.f32.mrb[0].mxu0
          %v732 = vadd.f32 0.0, %v731
          %v733 = vpop.f32.mrb[0].mxu0
          %v734 = vpop.f32.mrb[0].mxu0
          %v735 = vadd.f32 0.0, %v734
          %v736 = vpop.f32.mrb[0].mxu0
          %737 = vdwg.mxu0
          %v738 = vpack.c.bf16 %v735, %v732
          %739 = vst.msk [vmem:[#allocation4] sm:$0xff] %vm572, %v738
        $region104: #{tpu_custom_call.1} parent=75 // pred_fallthru
          _
        %s740 = scalar_lea.vmem %s561, %s563
        %v741 = vld [vmem:[%s740] sm:$0xff]
        %s742 = scalar_lea.vmem [#allocation2], %s563
        %v743 = vld [vmem:[%s742] sm:$0xff]
        %v744 = vpack.c.bf16 %v743, %v743
        %v745 = vld [vmem:[%s3] sm:$0xf]
        %v746 = vld [vmem:[%s3 + $0x4] sm:$0xf]
        %v747 = vld [vmem:[%s3 + $0x8] sm:$0xf]
        %v748 = vld [vmem:[%s3 + $0xc] sm:$0xf]
        %v753 = vunpack.c.l.b16 %v745
        %v754 = vunpack.c.l.b16 %v746
        %v755 = vunpack.c.l.b16 %v747
        %v756 = vunpack.c.l.b16 %v748
        %v757 = vpack.c.b16 %v754, %v753
        %v758 = vpack.c.b16 %v756, %v755
        %vm761 = vcmask 261120
        %v763 = vsel %vm761, %v744, 0
        %765 = vmatprep.subr.bf16.mxu0 0
        %766 = vmatpush1.bf16.msra.mxu0 %v757
        %767 = vmatprep.subr.bf16.mxu0 0
        %768 = vmatpush1.bf16.msra.mxu0 %v758
        %769 = vmatprep.subr.bf16.mxu0 0
        %770 = vmatpush1.bf16.msra.mxu0 0
        %771 = vmatprep.subr.bf16.mxu0 0
        %772 = vmatpush1.bf16.msra.mxu0 0
        %773 = vmatprep.subr.bf16.mxu0 0
        %774 = vmatpush1.bf16.msra.mxu0 0
        %775 = vmatprep.subr.bf16.mxu0 0
        %776 = vmatpush1.bf16.msra.mxu0 0
        %777 = vmatprep.subr.bf16.mxu0 0
        %778 = vmatpush1.bf16.msra.mxu0 0
        %779 = vmatprep.subr.bf16.mxu0 0
        %780 = vmatpush1.bf16.msra.mxu0 0
        %781 = vmatprep.subr.bf16.mxu0 0
        %782 = vmatpush1.bf16.msra.mxu0 0
        %783 = vmatprep.subr.bf16.mxu0 0
        %784 = vmatpush1.bf16.msra.mxu0 0
        %785 = vmatprep.subr.bf16.mxu0 0
        %786 = vmatpush1.bf16.msra.mxu0 0
        %787 = vmatprep.subr.bf16.mxu0 0
        %788 = vmatpush1.bf16.msra.mxu0 0
        %789 = vmatprep.subr.bf16.mxu0 0
        %790 = vmatpush1.bf16.msra.mxu0 0
        %791 = vmatprep.subr.bf16.mxu0 0
        %792 = vmatpush1.bf16.msra.mxu0 0
        %793 = vmatprep.subr.bf16.mxu0 0
        %794 = vmatpush1.bf16.msra.mxu0 0
        %795 = vmatprep.subr.bf16.mxu0 0
        %796 = vmatpush1.bf16.msra.mxu0 0
        %797 = vmatprep.mubr.bf16.mxu0 0
        %798 = vmatmul.mubr.bf16.gmra.mrb[0].mxu0 %v763
        %v799 = vpop.f32.mrb[0].mxu0
        %v800 = vadd.f32 0.0, %v799
        %v801 = vpop.f32.mrb[0].mxu0
        %v802 = vpop.f32.mrb[0].mxu0
        %v803 = vpop.f32.mrb[0].mxu0
        %804 = vdwg.mxu0
        %v805 = vmul.f32 %v800, 0.35355338
        %v806 = vpack.c.bf16 %v805, %v805
        %v807 = vld [vmem:[#allocation11] sm:$0x1]
        %v809 = vlaneseq
        %v810 = vshrl.u32 %v809, 7
        %v811 = vsub.s32 0, %v810
        %v812 = vrot.slane %v807, %v811
        %v814 = vadd.f32 %v741, %v812
        %v815 = vld [vmem:[#allocation3] sm:$0xff]
        %v816 = vld [vmem:[#allocation4] sm:$0xff]
        %vm817 = vcmask 64512
        %v819 = vsel %vm817, %v806, 0
        %v822 = vsel %vm817, %v815, 0
        %824 = vmatprep.subr.bf16.mxu0 0
        %825 = vmatpush1.bf16.xpose.msra.mxu0 %v822
        %826 = vmatprep.subr.bf16.mxu0 0
        %827 = vmatpush1.bf16.xpose.msra.mxu0 0
        %828 = vmatprep.subr.bf16.mxu0 0
        %829 = vmatpush1.bf16.xpose.msra.mxu0 0
        %830 = vmatprep.subr.bf16.mxu0 0
        %831 = vmatpush1.bf16.xpose.msra.mxu0 0
        %832 = vmatprep.subr.bf16.mxu0 0
        %833 = vmatpush1.bf16.xpose.msra.mxu0 0
        %834 = vmatprep.subr.bf16.mxu0 0
        %835 = vmatpush1.bf16.xpose.msra.mxu0 0
        %836 = vmatprep.subr.bf16.mxu0 0
        %837 = vmatpush1.bf16.xpose.msra.mxu0 0
        %838 = vmatprep.subr.bf16.mxu0 0
        %839 = vmatpush1.bf16.xpose.msra.mxu0 0
        %840 = vmatprep.subr.bf16.mxu0 0
        %841 = vmatpush1.bf16.xpose.msra.mxu0 0
        %842 = vmatprep.subr.bf16.mxu0 0
        %843 = vmatpush1.bf16.xpose.msra.mxu0 0
        %844 = vmatprep.subr.bf16.mxu0 0
        %845 = vmatpush1.bf16.xpose.msra.mxu0 0
        %846 = vmatprep.subr.bf16.mxu0 0
        %847 = vmatpush1.bf16.xpose.msra.mxu0 0
        %848 = vmatprep.subr.bf16.mxu0 0
        %849 = vmatpush1.bf16.xpose.msra.mxu0 0
        %850 = vmatprep.subr.bf16.mxu0 0
        %851 = vmatpush1.bf16.xpose.msra.mxu0 0
        %852 = vmatprep.subr.bf16.mxu0 0
        %853 = vmatpush1.bf16.xpose.msra.mxu0 0
        %854 = vmatprep.subr.bf16.mxu0 0
        %855 = vmatpush1.bf16.xpose.msra.mxu0 0
        %856 = vmatprep.mubr.bf16.mxu0 0
        %857 = vmatmul.mubr.bf16.gmra.mrb[0].mxu0 %v819
        %v858 = vpop.f32.mrb[0].mxu0
        %v859 = vadd.f32 0.0, %v858
        %v860 = vpop.f32.mrb[0].mxu0
        %v861 = vpop.f32.mrb[0].mxu0
        %v862 = vpop.f32.mrb[0].mxu0
        %863 = vdwg.mxu0
        %vm864 = vcmask 130048
        %v865 = vsel %vm864, %v859, -inf
        %866 = vmax.xlane.f32.xlu0 %v865
        %v867 = vpop.xlane.xlu0 %866
        %v868 = vsub.f32 %v859, %v867
        %v869 = vmul.f32 %v868, 1.442695
        %v870 = vpow.pop %v869
        %v871 = vsel %vm864, %v870, 0.0
        %872 = vadd.xlane.f32.xlu0 %v871
        %v873 = vpop.xlane.xlu0 %872
        %v874 = vpack.c.bf16 %v870, %v870
        %v876 = vsel %vm864, %v874, 0
        %878 = vmatprep.subr.bf16.mxu0 0
        %879 = vmatpush1.bf16.msra.mxu0 %v816
        %880 = vmatprep.subr.bf16.mxu0 0
        %881 = vmatpush1.bf16.msra.mxu0 0
        %882 = vmatprep.subr.bf16.mxu0 0
        %883 = vmatpush1.bf16.msra.mxu0 0
        %884 = vmatprep.subr.bf16.mxu0 0
        %885 = vmatpush1.bf16.msra.mxu0 0
        %886 = vmatprep.subr.bf16.mxu0 0
        %887 = vmatpush1.bf16.msra.mxu0 0
        %888 = vmatprep.subr.bf16.mxu0 0
        %889 = vmatpush1.bf16.msra.mxu0 0
        %890 = vmatprep.subr.bf16.mxu0 0
        %891 = vmatpush1.bf16.msra.mxu0 0
        %892 = vmatprep.subr.bf16.mxu0 0
        %893 = vmatpush1.bf16.msra.mxu0 0
        %894 = vmatprep.subr.bf16.mxu0 0
        %895 = vmatpush1.bf16.msra.mxu0 0
        %896 = vmatprep.subr.bf16.mxu0 0
        %897 = vmatpush1.bf16.msra.mxu0 0
        %898 = vmatprep.subr.bf16.mxu0 0
        %899 = vmatpush1.bf16.msra.mxu0 0
        %900 = vmatprep.subr.bf16.mxu0 0
        %901 = vmatpush1.bf16.msra.mxu0 0
        %902 = vmatprep.subr.bf16.mxu0 0
        %903 = vmatpush1.bf16.msra.mxu0 0
        %904 = vmatprep.subr.bf16.mxu0 0
        %905 = vmatpush1.bf16.msra.mxu0 0
        %906 = vmatprep.subr.bf16.mxu0 0
        %907 = vmatpush1.bf16.msra.mxu0 0
        %908 = vmatprep.subr.bf16.mxu0 0
        %909 = vmatpush1.bf16.msra.mxu0 0
        %910 = vmatprep.mubr.bf16.mxu0 0
        %911 = vmatmul.mubr.bf16.gmra.mrb[0].mxu0 %v876
        %v912 = vpop.f32.mrb[0].mxu0
        %v913 = vadd.f32 0.0, %v912
        %v914 = vpop.f32.mrb[0].mxu0
        %v915 = vpop.f32.mrb[0].mxu0
        %v916 = vpop.f32.mrb[0].mxu0
        %917 = vdwg.mxu0
        %v918 = vrcp.pop %v873
        %v919 = vmul.f32 %v913, %v918
        %v920 = vpack.c.bf16 %v919, %v919
        %v921 = vld [vmem:[#allocation10] sm:$0xf]
        %v923 = vsel %vm817, %v920, 0
        %vm925 = vcmask 1043456
        %v927 = vsel %vm925, %v921, 0
        %929 = vmatprep.subr.bf16.mxu0 0
        %930 = vmatpush1.bf16.msra.mxu0 %v927
        %931 = vmatprep.subr.bf16.mxu0 0
        %932 = vmatpush1.bf16.msra.mxu0 0
        %933 = vmatprep.subr.bf16.mxu0 0
        %934 = vmatpush1.bf16.msra.mxu0 0
        %935 = vmatprep.subr.bf16.mxu0 0
        %936 = vmatpush1.bf16.msra.mxu0 0
        %937 = vmatprep.subr.bf16.mxu0 0
        %938 = vmatpush1.bf16.msra.mxu0 0
        %939 = vmatprep.subr.bf16.mxu0 0
        %940 = vmatpush1.bf16.msra.mxu0 0
        %941 = vmatprep.subr.bf16.mxu0 0
        %942 = vmatpush1.bf16.msra.mxu0 0
        %943 = vmatprep.subr.bf16.mxu0 0
        %944 = vmatpush1.bf16.msra.mxu0 0
        %945 = vmatprep.subr.bf16.mxu0 0
        %946 = vmatpush1.bf16.msra.mxu0 0
        %947 = vmatprep.subr.bf16.mxu0 0
        %948 = vmatpush1.bf16.msra.mxu0 0
        %949 = vmatprep.subr.bf16.mxu0 0
        %950 = vmatpush1.bf16.msra.mxu0 0
        %951 = vmatprep.subr.bf16.mxu0 0
        %952 = vmatpush1.bf16.msra.mxu0 0
        %953 = vmatprep.subr.bf16.mxu0 0
        %954 = vmatpush1.bf16.msra.mxu0 0
        %955 = vmatprep.subr.bf16.mxu0 0
        %956 = vmatpush1.bf16.msra.mxu0 0
        %957 = vmatprep.subr.bf16.mxu0 0
        %958 = vmatpush1.bf16.msra.mxu0 0
        %959 = vmatprep.subr.bf16.mxu0 0
        %960 = vmatpush1.bf16.msra.mxu0 0
        %961 = vmatprep.mubr.bf16.mxu0 0
        %962 = vmatmul.mubr.bf16.gmra.mrb[0].mxu0 %v923
        %v963 = vpop.f32.mrb[0].mxu0
        %v964 = vadd.f32 0.0, %v963
        %v965 = vpop.f32.mrb[0].mxu0
        %v966 = vpop.f32.mrb[0].mxu0
        %v967 = vpop.f32.mrb[0].mxu0
        %968 = vdwg.mxu0
        %v969 = vadd.f32 %v814, %v964
        %971 = vrot.lane.b32.xlu0 %v806, 120
        %v972 = vpop.permute.xlu0 %971
        %974 = vrot.lane.b32.xlu0 %v815, 120
        %v975 = vpop.permute.xlu0 %974
        %v977 = vsel %vm817, %v972, 0
        %v980 = vsel %vm817, %v975, 0
        %982 = vmatprep.subr.bf16.mxu0 0
        %983 = vmatpush1.bf16.xpose.msra.mxu0 %v980
        %984 = vmatprep.subr.bf16.mxu0 0
        %985 = vmatpush1.bf16.xpose.msra.mxu0 0
        %986 = vmatprep.subr.bf16.mxu0 0
        %987 = vmatpush1.bf16.xpose.msra.mxu0 0
        %988 = vmatprep.subr.bf16.mxu0 0
        %989 = vmatpush1.bf16.xpose.msra.mxu0 0
        %990 = vmatprep.subr.bf16.mxu0 0
        %991 = vmatpush1.bf16.xpose.msra.mxu0 0
        %992 = vmatprep.subr.bf16.mxu0 0
        %993 = vmatpush1.bf16.xpose.msra.mxu0 0
        %994 = vmatprep.subr.bf16.mxu0 0
        %995 = vmatpush1.bf16.xpose.msra.mxu0 0
        %996 = vmatprep.subr.bf16.mxu0 0
        %997 = vmatpush1.bf16.xpose.msra.mxu0 0
        %998 = vmatprep.subr.bf16.mxu0 0
        %999 = vmatpush1.bf16.xpose.msra.mxu0 0
        %1000 = vmatprep.subr.bf16.mxu0 0
        %1001 = vmatpush1.bf16.xpose.msra.mxu0 0
        %1002 = vmatprep.subr.bf16.mxu0 0
        %1003 = vmatpush1.bf16.xpose.msra.mxu0 0
        %1004 = vmatprep.subr.bf16.mxu0 0
        %1005 = vmatpush1.bf16.xpose.msra.mxu0 0
        %1006 = vmatprep.subr.bf16.mxu0 0
        %1007 = vmatpush1.bf16.xpose.msra.mxu0 0
        %1008 = vmatprep.subr.bf16.mxu0 0
        %1009 = vmatpush1.bf16.xpose.msra.mxu0 0
        %1010 = vmatprep.subr.bf16.mxu0 0
        %1011 = vmatpush1.bf16.xpose.msra.mxu0 0
        %1012 = vmatprep.subr.bf16.mxu0 0
        %1013 = vmatpush1.bf16.xpose.msra.mxu0 0
        %1014 = vmatprep.mubr.bf16.mxu0 0
        %1015 = vmatmul.mubr.bf16.gmra.mrb[0].mxu0 %v977
        %v1016 = vpop.f32.mrb[0].mxu0
        %v1017 = vadd.f32 0.0, %v1016
        %v1018 = vpop.f32.mrb[0].mxu0
        %v1019 = vpop.f32.mrb[0].mxu0
        %v1020 = vpop.f32.mrb[0].mxu0
        %1021 = vdwg.mxu0
        %v1022 = vsel %vm864, %v1017, -inf
        %1023 = vmax.xlane.f32.xlu0 %v1022
        %v1024 = vpop.xlane.xlu0 %1023
        %v1025 = vsub.f32 %v1017, %v1024
        %v1026 = vmul.f32 %v1025, 1.442695
        %v1027 = vpow.pop %v1026
        %v1028 = vsel %vm864, %v1027, 0.0
        %1029 = vadd.xlane.f32.xlu0 %v1028
        %v1030 = vpop.xlane.xlu0 %1029
        %v1031 = vpack.c.bf16 %v1027, %v1027
        %1033 = vrot.lane.b32.xlu0 %v816, 120
        %v1034 = vpop.permute.xlu0 %1033
        %v1037 = vsel %vm864, %v1031, 0
        %1039 = vmatprep.subr.bf16.mxu0 0
        %1040 = vmatpush1.bf16.msra.mxu0 %v1034
        %1041 = vmatprep.subr.bf16.mxu0 0
        %1042 = vmatpush1.bf16.msra.mxu0 0
        %1043 = vmatprep.subr.bf16.mxu0 0
        %1044 = vmatpush1.bf16.msra.mxu0 0
        %1045 = vmatprep.subr.bf16.mxu0 0
        %1046 = vmatpush1.bf16.msra.mxu0 0
        %1047 = vmatprep.subr.bf16.mxu0 0
        %1048 = vmatpush1.bf16.msra.mxu0 0
        %1049 = vmatprep.subr.bf16.mxu0 0
        %1050 = vmatpush1.bf16.msra.mxu0 0
        %1051 = vmatprep.subr.bf16.mxu0 0
        %1052 = vmatpush1.bf16.msra.mxu0 0
        %1053 = vmatprep.subr.bf16.mxu0 0
        %1054 = vmatpush1.bf16.msra.mxu0 0
        %1055 = vmatprep.subr.bf16.mxu0 0
        %1056 = vmatpush1.bf16.msra.mxu0 0
        %1057 = vmatprep.subr.bf16.mxu0 0
        %1058 = vmatpush1.bf16.msra.mxu0 0
        %1059 = vmatprep.subr.bf16.mxu0 0
        %1060 = vmatpush1.bf16.msra.mxu0 0
        %1061 = vmatprep.subr.bf16.mxu0 0
        %1062 = vmatpush1.bf16.msra.mxu0 0
        %1063 = vmatprep.subr.bf16.mxu0 0
        %1064 = vmatpush1.bf16.msra.mxu0 0
        %1065 = vmatprep.subr.bf16.mxu0 0
        %1066 = vmatpush1.bf16.msra.mxu0 0
        %1067 = vmatprep.subr.bf16.mxu0 0
        %1068 = vmatpush1.bf16.msra.mxu0 0
        %1069 = vmatprep.subr.bf16.mxu0 0
        %1070 = vmatpush1.bf16.msra.mxu0 0
        %1071 = vmatprep.mubr.bf16.mxu0 0
        %1072 = vmatmul.mubr.bf16.gmra.mrb[0].mxu0 %v1037
        %v1073 = vpop.f32.mrb[0].mxu0
        %v1074 = vadd.f32 0.0, %v1073
        %v1075 = vpop.f32.mrb[0].mxu0
        %v1076 = vpop.f32.mrb[0].mxu0
        %v1077 = vpop.f32.mrb[0].mxu0
        %1078 = vdwg.mxu0
        %v1079 = vrcp.pop %v1030
        %v1080 = vmul.f32 %v1074, %v1079
        %v1081 = vpack.c.bf16 %v1080, %v1080
        %v1082 = vld [vmem:[#allocation10 + $0x4] sm:$0xf]
        %v1084 = vsel %vm817, %v1081, 0
        %v1087 = vsel %vm925, %v1082, 0
        %1089 = vmatprep.subr.bf16.mxu0 0
        %1090 = vmatpush1.bf16.msra.mxu0 %v1087
        %1091 = vmatprep.subr.bf16.mxu0 0
        %1092 = vmatpush1.bf16.msra.mxu0 0
        %1093 = vmatprep.subr.bf16.mxu0 0
        %1094 = vmatpush1.bf16.msra.mxu0 0
        %1095 = vmatprep.subr.bf16.mxu0 0
        %1096 = vmatpush1.bf16.msra.mxu0 0
        %1097 = vmatprep.subr.bf16.mxu0 0
        %1098 = vmatpush1.bf16.msra.mxu0 0
        %1099 = vmatprep.subr.bf16.mxu0 0
        %1100 = vmatpush1.bf16.msra.mxu0 0
        %1101 = vmatprep.subr.bf16.mxu0 0
        %1102 = vmatpush1.bf16.msra.mxu0 0
        %1103 = vmatprep.subr.bf16.mxu0 0
        %1104 = vmatpush1.bf16.msra.mxu0 0
        %1105 = vmatprep.subr.bf16.mxu0 0
        %1106 = vmatpush1.bf16.msra.mxu0 0
        %1107 = vmatprep.subr.bf16.mxu0 0
        %1108 = vmatpush1.bf16.msra.mxu0 0
        %1109 = vmatprep.subr.bf16.mxu0 0
        %1110 = vmatpush1.bf16.msra.mxu0 0
        %1111 = vmatprep.subr.bf16.mxu0 0
        %1112 = vmatpush1.bf16.msra.mxu0 0
        %1113 = vmatprep.subr.bf16.mxu0 0
        %1114 = vmatpush1.bf16.msra.mxu0 0
        %1115 = vmatprep.subr.bf16.mxu0 0
        %1116 = vmatpush1.bf16.msra.mxu0 0
        %1117 = vmatprep.subr.bf16.mxu0 0
        %1118 = vmatpush1.bf16.msra.mxu0 0
        %1119 = vmatprep.subr.bf16.mxu0 0
        %1120 = vmatpush1.bf16.msra.mxu0 0
        %1121 = vmatprep.mubr.bf16.mxu0 0
        %1122 = vmatmul.mubr.bf16.gmra.mrb[0].mxu0 %v1084
        %v1123 = vpop.f32.mrb[0].mxu0
        %v1124 = vadd.f32 0.0, %v1123
        %v1125 = vpop.f32.mrb[0].mxu0
        %v1126 = vpop.f32.mrb[0].mxu0
        %v1127 = vpop.f32.mrb[0].mxu0
        %1128 = vdwg.mxu0
        %v1129 = vadd.f32 %v969, %v1124
        %1130 = vrot.lane.b32.xlu0 %v806, 112
        %v1131 = vpop.permute.xlu0 %1130
        %1132 = vrot.lane.b32.xlu0 %v815, 112
        %v1133 = vpop.permute.xlu0 %1132
        %v1135 = vsel %vm817, %v1131, 0
        %v1138 = vsel %vm817, %v1133, 0
        %1140 = vmatprep.subr.bf16.mxu0 0
        %1141 = vmatpush1.bf16.xpose.msra.mxu0 %v1138
        %1142 = vmatprep.subr.bf16.mxu0 0
        %1143 = vmatpush1.bf16.xpose.msra.mxu0 0
        %1144 = vmatprep.subr.bf16.mxu0 0
        %1145 = vmatpush1.bf16.xpose.msra.mxu0 0
        %1146 = vmatprep.subr.bf16.mxu0 0
        %1147 = vmatpush1.bf16.xpose.msra.mxu0 0
        %1148 = vmatprep.subr.bf16.mxu0 0
        %1149 = vmatpush1.bf16.xpose.msra.mxu0 0
        %1150 = vmatprep.subr.bf16.mxu0 0
        %1151 = vmatpush1.bf16.xpose.msra.mxu0 0
        %1152 = vmatprep.subr.bf16.mxu0 0
        %1153 = vmatpush1.bf16.xpose.msra.mxu0 0
        %1154 = vmatprep.subr.bf16.mxu0 0
        %1155 = vmatpush1.bf16.xpose.msra.mxu0 0
        %1156 = vmatprep.subr.bf16.mxu0 0
        %1157 = vmatpush1.bf16.xpose.msra.mxu0 0
        %1158 = vmatprep.subr.bf16.mxu0 0
        %1159 = vmatpush1.bf16.xpose.msra.mxu0 0
        %1160 = vmatprep.subr.bf16.mxu0 0
        %1161 = vmatpush1.bf16.xpose.msra.mxu0 0
        %1162 = vmatprep.subr.bf16.mxu0 0
        %1163 = vmatpush1.bf16.xpose.msra.mxu0 0
        %1164 = vmatprep.subr.bf16.mxu0 0
        %1165 = vmatpush1.bf16.xpose.msra.mxu0 0
        %1166 = vmatprep.subr.bf16.mxu0 0
        %1167 = vmatpush1.bf16.xpose.msra.mxu0 0
        %1168 = vmatprep.subr.bf16.mxu0 0
        %1169 = vmatpush1.bf16.xpose.msra.mxu0 0
        %1170 = vmatprep.subr.bf16.mxu0 0
        %1171 = vmatpush1.bf16.xpose.msra.mxu0 0
        %1172 = vmatprep.mubr.bf16.mxu0 0
        %1173 = vmatmul.mubr.bf16.gmra.mrb[0].mxu0 %v1135
        %v1174 = vpop.f32.mrb[0].mxu0
        %v1175 = vadd.f32 0.0, %v1174
        %v1176 = vpop.f32.mrb[0].mxu0
        %v1177 = vpop.f32.mrb[0].mxu0
        %v1178 = vpop.f32.mrb[0].mxu0
        %1179 = vdwg.mxu0
        %v1180 = vsel %vm864, %v1175, -inf
        %1181 = vmax.xlane.f32.xlu0 %v1180
        %v1182 = vpop.xlane.xlu0 %1181
        %v1183 = vsub.f32 %v1175, %v1182
        %v1184 = vmul.f32 %v1183, 1.442695
        %v1185 = vpow.pop %v1184
        %v1186 = vsel %vm864, %v1185, 0.0
        %1187 = vadd.xlane.f32.xlu0 %v1186
        %v1188 = vpop.xlane.xlu0 %1187
        %v1189 = vpack.c.bf16 %v1185, %v1185
        %1190 = vrot.lane.b32.xlu0 %v816, 112
        %v1191 = vpop.permute.xlu0 %1190
        %v1194 = vsel %vm864, %v1189, 0
        %1196 = vmatprep.subr.bf16.mxu0 0
        %1197 = vmatpush1.bf16.msra.mxu0 %v1191
        %1198 = vmatprep.subr.bf16.mxu0 0
        %1199 = vmatpush1.bf16.msra.mxu0 0
        %1200 = vmatprep.subr.bf16.mxu0 0
        %1201 = vmatpush1.bf16.msra.mxu0 0
        %1202 = vmatprep.subr.bf16.mxu0 0
        %1203 = vmatpush1.bf16.msra.mxu0 0
        %1204 = vmatprep.subr.bf16.mxu0 0
        %1205 = vmatpush1.bf16.msra.mxu0 0
        %1206 = vmatprep.subr.bf16.mxu0 0
        %1207 = vmatpush1.bf16.msra.mxu0 0
        %1208 = vmatprep.subr.bf16.mxu0 0
        %1209 = vmatpush1.bf16.msra.mxu0 0
        %1210 = vmatprep.subr.bf16.mxu0 0
        %1211 = vmatpush1.bf16.msra.mxu0 0
        %1212 = vmatprep.subr.bf16.mxu0 0
        %1213 = vmatpush1.bf16.msra.mxu0 0
        %1214 = vmatprep.subr.bf16.mxu0 0
        %1215 = vmatpush1.bf16.msra.mxu0 0
        %1216 = vmatprep.subr.bf16.mxu0 0
        %1217 = vmatpush1.bf16.msra.mxu0 0
        %1218 = vmatprep.subr.bf16.mxu0 0
        %1219 = vmatpush1.bf16.msra.mxu0 0
        %1220 = vmatprep.subr.bf16.mxu0 0
        %1221 = vmatpush1.bf16.msra.mxu0 0
        %1222 = vmatprep.subr.bf16.mxu0 0
        %1223 = vmatpush1.bf16.msra.mxu0 0
        %1224 = vmatprep.subr.bf16.mxu0 0
        %1225 = vmatpush1.bf16.msra.mxu0 0
        %1226 = vmatprep.subr.bf16.mxu0 0
        %1227 = vmatpush1.bf16.msra.mxu0 0
        %1228 = vmatprep.mubr.bf16.mxu0 0
        %1229 = vmatmul.mubr.bf16.gmra.mrb[0].mxu0 %v1194
        %v1230 = vpop.f32.mrb[0].mxu0
        %v1231 = vadd.f32 0.0, %v1230
        %v1232 = vpop.f32.mrb[0].mxu0
        %v1233 = vpop.f32.mrb[0].mxu0
        %v1234 = vpop.f32.mrb[0].mxu0
        %1235 = vdwg.mxu0
        %v1236 = vrcp.pop %v1188
        %v1237 = vmul.f32 %v1231, %v1236
        %v1238 = vpack.c.bf16 %v1237, %v1237
        %v1239 = vld [vmem:[#allocation10 + $0x8] sm:$0xf]
        %v1241 = vsel %vm817, %v1238, 0
        %v1244 = vsel %vm925, %v1239, 0
        %1246 = vmatprep.subr.bf16.mxu0 0
        %1247 = vmatpush1.bf16.msra.mxu0 %v1244
        %1248 = vmatprep.subr.bf16.mxu0 0
        %1249 = vmatpush1.bf16.msra.mxu0 0
        %1250 = vmatprep.subr.bf16.mxu0 0
        %1251 = vmatpush1.bf16.msra.mxu0 0
        %1252 = vmatprep.subr.bf16.mxu0 0
        %1253 = vmatpush1.bf16.msra.mxu0 0
        %1254 = vmatprep.subr.bf16.mxu0 0
        %1255 = vmatpush1.bf16.msra.mxu0 0
        %1256 = vmatprep.subr.bf16.mxu0 0
        %1257 = vmatpush1.bf16.msra.mxu0 0
        %1258 = vmatprep.subr.bf16.mxu0 0
        %1259 = vmatpush1.bf16.msra.mxu0 0
        %1260 = vmatprep.subr.bf16.mxu0 0
        %1261 = vmatpush1.bf16.msra.mxu0 0
        %1262 = vmatprep.subr.bf16.mxu0 0
        %1263 = vmatpush1.bf16.msra.mxu0 0
        %1264 = vmatprep.subr.bf16.mxu0 0
        %1265 = vmatpush1.bf16.msra.mxu0 0
        %1266 = vmatprep.subr.bf16.mxu0 0
        %1267 = vmatpush1.bf16.msra.mxu0 0
        %1268 = vmatprep.subr.bf16.mxu0 0
        %1269 = vmatpush1.bf16.msra.mxu0 0
        %1270 = vmatprep.subr.bf16.mxu0 0
        %1271 = vmatpush1.bf16.msra.mxu0 0
        %1272 = vmatprep.subr.bf16.mxu0 0
        %1273 = vmatpush1.bf16.msra.mxu0 0
        %1274 = vmatprep.subr.bf16.mxu0 0
        %1275 = vmatpush1.bf16.msra.mxu0 0
        %1276 = vmatprep.subr.bf16.mxu0 0
        %1277 = vmatpush1.bf16.msra.mxu0 0
        %1278 = vmatprep.mubr.bf16.mxu0 0
        %1279 = vmatmul.mubr.bf16.gmra.mrb[0].mxu0 %v1241
        %v1280 = vpop.f32.mrb[0].mxu0
        %v1281 = vadd.f32 0.0, %v1280
        %v1282 = vpop.f32.mrb[0].mxu0
        %v1283 = vpop.f32.mrb[0].mxu0
        %v1284 = vpop.f32.mrb[0].mxu0
        %1285 = vdwg.mxu0
        %v1286 = vadd.f32 %v1129, %v1281
        %1287 = vrot.lane.b32.xlu0 %v806, 104
        %v1288 = vpop.permute.xlu0 %1287
        %1289 = vrot.lane.b32.xlu0 %v815, 104
        %v1290 = vpop.permute.xlu0 %1289
        %v1292 = vsel %vm817, %v1288, 0
        %v1295 = vsel %vm817, %v1290, 0
        %1297 = vmatprep.subr.bf16.mxu0 0
        %1298 = vmatpush1.bf16.xpose.msra.mxu0 %v1295
        %1299 = vmatprep.subr.bf16.mxu0 0
        %1300 = vmatpush1.bf16.xpose.msra.mxu0 0
        %1301 = vmatprep.subr.bf16.mxu0 0
        %1302 = vmatpush1.bf16.xpose.msra.mxu0 0
        %1303 = vmatprep.subr.bf16.mxu0 0
        %1304 = vmatpush1.bf16.xpose.msra.mxu0 0
        %1305 = vmatprep.subr.bf16.mxu0 0
        %1306 = vmatpush1.bf16.xpose.msra.mxu0 0
        %1307 = vmatprep.subr.bf16.mxu0 0
        %1308 = vmatpush1.bf16.xpose.msra.mxu0 0
        %1309 = vmatprep.subr.bf16.mxu0 0
        %1310 = vmatpush1.bf16.xpose.msra.mxu0 0
        %1311 = vmatprep.subr.bf16.mxu0 0
        %1312 = vmatpush1.bf16.xpose.msra.mxu0 0
        %1313 = vmatprep.subr.bf16.mxu0 0
        %1314 = vmatpush1.bf16.xpose.msra.mxu0 0
        %1315 = vmatprep.subr.bf16.mxu0 0
        %1316 = vmatpush1.bf16.xpose.msra.mxu0 0
        %1317 = vmatprep.subr.bf16.mxu0 0
        %1318 = vmatpush1.bf16.xpose.msra.mxu0 0
        %1319 = vmatprep.subr.bf16.mxu0 0
        %1320 = vmatpush1.bf16.xpose.msra.mxu0 0
        %1321 = vmatprep.subr.bf16.mxu0 0
        %1322 = vmatpush1.bf16.xpose.msra.mxu0 0
        %1323 = vmatprep.subr.bf16.mxu0 0
        %1324 = vmatpush1.bf16.xpose.msra.mxu0 0
        %1325 = vmatprep.subr.bf16.mxu0 0
        %1326 = vmatpush1.bf16.xpose.msra.mxu0 0
        %1327 = vmatprep.subr.bf16.mxu0 0
        %1328 = vmatpush1.bf16.xpose.msra.mxu0 0
        %1329 = vmatprep.mubr.bf16.mxu0 0
        %1330 = vmatmul.mubr.bf16.gmra.mrb[0].mxu0 %v1292
        %v1331 = vpop.f32.mrb[0].mxu0
        %v1332 = vadd.f32 0.0, %v1331
        %v1333 = vpop.f32.mrb[0].mxu0
        %v1334 = vpop.f32.mrb[0].mxu0
        %v1335 = vpop.f32.mrb[0].mxu0
        %1336 = vdwg.mxu0
        %v1337 = vsel %vm864, %v1332, -inf
        %1338 = vmax.xlane.f32.xlu0 %v1337
        %v1339 = vpop.xlane.xlu0 %1338
        %v1340 = vsub.f32 %v1332, %v1339
        %v1341 = vmul.f32 %v1340, 1.442695
        %v1342 = vpow.pop %v1341
        %v1343 = vsel %vm864, %v1342, 0.0
        %1344 = vadd.xlane.f32.xlu0 %v1343
        %v1345 = vpop.xlane.xlu0 %1344
        %v1346 = vpack.c.bf16 %v1342, %v1342
        %1347 = vrot.lane.b32.xlu0 %v816, 104
        %v1348 = vpop.permute.xlu0 %1347
        %v1351 = vsel %vm864, %v1346, 0
        %1353 = vmatprep.subr.bf16.mxu0 0
        %1354 = vmatpush1.bf16.msra.mxu0 %v1348
        %1355 = vmatprep.subr.bf16.mxu0 0
        %1356 = vmatpush1.bf16.msra.mxu0 0
        %1357 = vmatprep.subr.bf16.mxu0 0
        %1358 = vmatpush1.bf16.msra.mxu0 0
        %1359 = vmatprep.subr.bf16.mxu0 0
        %1360 = vmatpush1.bf16.msra.mxu0 0
        %1361 = vmatprep.subr.bf16.mxu0 0
        %1362 = vmatpush1.bf16.msra.mxu0 0
        %1363 = vmatprep.subr.bf16.mxu0 0
        %1364 = vmatpush1.bf16.msra.mxu0 0
        %1365 = vmatprep.subr.bf16.mxu0 0
        %1366 = vmatpush1.bf16.msra.mxu0 0
        %1367 = vmatprep.subr.bf16.mxu0 0
        %1368 = vmatpush1.bf16.msra.mxu0 0
        %1369 = vmatprep.subr.bf16.mxu0 0
        %1370 = vmatpush1.bf16.msra.mxu0 0
        %1371 = vmatprep.subr.bf16.mxu0 0
        %1372 = vmatpush1.bf16.msra.mxu0 0
        %1373 = vmatprep.subr.bf16.mxu0 0
        %1374 = vmatpush1.bf16.msra.mxu0 0
        %1375 = vmatprep.subr.bf16.mxu0 0
        %1376 = vmatpush1.bf16.msra.mxu0 0
        %1377 = vmatprep.subr.bf16.mxu0 0
        %1378 = vmatpush1.bf16.msra.mxu0 0
        %1379 = vmatprep.subr.bf16.mxu0 0
        %1380 = vmatpush1.bf16.msra.mxu0 0
        %1381 = vmatprep.subr.bf16.mxu0 0
        %1382 = vmatpush1.bf16.msra.mxu0 0
        %1383 = vmatprep.subr.bf16.mxu0 0
        %1384 = vmatpush1.bf16.msra.mxu0 0
        %1385 = vmatprep.mubr.bf16.mxu0 0
        %1386 = vmatmul.mubr.bf16.gmra.mrb[0].mxu0 %v1351
        %v1387 = vpop.f32.mrb[0].mxu0
        %v1388 = vadd.f32 0.0, %v1387
        %v1389 = vpop.f32.mrb[0].mxu0
        %v1390 = vpop.f32.mrb[0].mxu0
        %v1391 = vpop.f32.mrb[0].mxu0
        %1392 = vdwg.mxu0
        %v1393 = vrcp.pop %v1345
        %v1394 = vmul.f32 %v1388, %v1393
        %v1395 = vpack.c.bf16 %v1394, %v1394
        %v1396 = vld [vmem:[#allocation10 + $0xc] sm:$0xf]
        %v1398 = vsel %vm817, %v1395, 0
        %v1401 = vsel %vm925, %v1396, 0
        %1403 = vmatprep.subr.bf16.mxu0 0
        %1404 = vmatpush1.bf16.msra.mxu0 %v1401
        %1405 = vmatprep.subr.bf16.mxu0 0
        %1406 = vmatpush1.bf16.msra.mxu0 0
        %1407 = vmatprep.subr.bf16.mxu0 0
        %1408 = vmatpush1.bf16.msra.mxu0 0
        %1409 = vmatprep.subr.bf16.mxu0 0
        %1410 = vmatpush1.bf16.msra.mxu0 0
        %1411 = vmatprep.subr.bf16.mxu0 0
        %1412 = vmatpush1.bf16.msra.mxu0 0
        %1413 = vmatprep.subr.bf16.mxu0 0
        %1414 = vmatpush1.bf16.msra.mxu0 0
        %1415 = vmatprep.subr.bf16.mxu0 0
        %1416 = vmatpush1.bf16.msra.mxu0 0
        %1417 = vmatprep.subr.bf16.mxu0 0
        %1418 = vmatpush1.bf16.msra.mxu0 0
        %1419 = vmatprep.subr.bf16.mxu0 0
        %1420 = vmatpush1.bf16.msra.mxu0 0
        %1421 = vmatprep.subr.bf16.mxu0 0
        %1422 = vmatpush1.bf16.msra.mxu0 0
        %1423 = vmatprep.subr.bf16.mxu0 0
        %1424 = vmatpush1.bf16.msra.mxu0 0
        %1425 = vmatprep.subr.bf16.mxu0 0
        %1426 = vmatpush1.bf16.msra.mxu0 0
        %1427 = vmatprep.subr.bf16.mxu0 0
        %1428 = vmatpush1.bf16.msra.mxu0 0
        %1429 = vmatprep.subr.bf16.mxu0 0
        %1430 = vmatpush1.bf16.msra.mxu0 0
        %1431 = vmatprep.subr.bf16.mxu0 0
        %1432 = vmatpush1.bf16.msra.mxu0 0
        %1433 = vmatprep.subr.bf16.mxu0 0
        %1434 = vmatpush1.bf16.msra.mxu0 0
        %1435 = vmatprep.mubr.bf16.mxu0 0
        %1436 = vmatmul.mubr.bf16.gmra.mrb[0].mxu0 %v1398
        %v1437 = vpop.f32.mrb[0].mxu0
        %v1438 = vadd.f32 0.0, %v1437
        %v1439 = vpop.f32.mrb[0].mxu0
        %v1440 = vpop.f32.mrb[0].mxu0
        %v1441 = vpop.f32.mrb[0].mxu0
        %1442 = vdwg.mxu0
        %v1443 = vadd.f32 %v1286, %v1438
        %v1444 = vld [vmem:[#allocation13] sm:$0x1]
        %v1445 = vld [vmem:[#allocation14] sm:$0x1]
        %v1446 = vsel %vm761, %v1443, 0.0
        %1447 = vadd.xlane.f32.xlu0 %v1446
        %v1448 = vpop.xlane.xlu0 %1447
        %v1449 = vrcp.pop 32.0
        %v1450 = vmul.f32 %v1448, %v1449
        %v1451 = vsub.f32 %v1443, %v1450
        %v1452 = vmul.f32 %v1451, %v1451
        %v1453 = vsel %vm761, %v1452, 0.0
        %1454 = vadd.xlane.f32.xlu0 %v1453
        %v1455 = vpop.xlane.xlu0 %1454
        %v1456 = vmul.f32 %v1455, %v1449
        %v1457 = vadd.f32 %v1456, 1e-05
        %v1458 = vrsqrt.pop %v1457
        %v1459 = vmul.f32 %v1451, %v1458
        %v1461 = vlaneseq
        %v1462 = vshrl.u32 %v1461, 7
        %v1463 = vsub.s32 0, %v1462
        %v1464 = vrot.slane %v1444, %v1463
        %v1466 = vmul.f32 %v1459, %v1464
        %v1468 = vlaneseq
        %v1469 = vshrl.u32 %v1468, 7
        %v1470 = vsub.s32 0, %v1469
        %v1471 = vrot.slane %v1445, %v1470
        %v1473 = vadd.f32 %v1466, %v1471
        %v1474 = vpack.c.bf16 %v1473, %v1473
        %v1475 = vld [vmem:[%s10] sm:$0xf]
        %v1476 = vld [vmem:[%s10 + $0x4] sm:$0xf]
        %v1477 = vld [vmem:[%s10 + $0x8] sm:$0xf]
        %v1478 = vld [vmem:[%s10 + $0xc] sm:$0xf]
        %v1479 = vld [vmem:[%s11] sm:$0x1]
        %v1481 = vlaneseq
        %v1482 = vshrl.u32 %v1481, 7
        %v1483 = vsub.s32 0, %v1482
        %v1484 = vrot.slane %v1479, %v1483
        %v1490 = vunpack.c.l.b16 %v1475
        %v1491 = vunpack.c.l.b16 %v1476
        %v1492 = vunpack.c.l.b16 %v1477
        %v1493 = vunpack.c.l.b16 %v1478
        %v1494 = vpack.c.b16 %v1491, %v1490
        %v1495 = vpack.c.b16 %v1493, %v1492
        %v1499 = vsel %vm761, %v1474, 0
        %1501 = vmatprep.subr.bf16.mxu0 0
        %1502 = vmatpush1.bf16.msra.mxu0 %v1494
        %1503 = vmatprep.subr.bf16.mxu0 0
        %1504 = vmatpush1.bf16.msra.mxu0 %v1495
        %1505 = vmatprep.subr.bf16.mxu0 0
        %1506 = vmatpush1.bf16.msra.mxu0 0
        %1507 = vmatprep.subr.bf16.mxu0 0
        %1508 = vmatpush1.bf16.msra.mxu0 0
        %1509 = vmatprep.subr.bf16.mxu0 0
        %1510 = vmatpush1.bf16.msra.mxu0 0
        %1511 = vmatprep.subr.bf16.mxu0 0
        %1512 = vmatpush1.bf16.msra.mxu0 0
        %1513 = vmatprep.subr.bf16.mxu0 0
        %1514 = vmatpush1.bf16.msra.mxu0 0
        %1515 = vmatprep.subr.bf16.mxu0 0
        %1516 = vmatpush1.bf16.msra.mxu0 0
        %1517 = vmatprep.subr.bf16.mxu0 0
        %1518 = vmatpush1.bf16.msra.mxu0 0
        %1519 = vmatprep.subr.bf16.mxu0 0
        %1520 = vmatpush1.bf16.msra.mxu0 0
        %1521 = vmatprep.subr.bf16.mxu0 0
        %1522 = vmatpush1.bf16.msra.mxu0 0
        %1523 = vmatprep.subr.bf16.mxu0 0
        %1524 = vmatpush1.bf16.msra.mxu0 0
        %1525 = vmatprep.subr.bf16.mxu0 0
        %1526 = vmatpush1.bf16.msra.mxu0 0
        %1527 = vmatprep.subr.bf16.mxu0 0
        %1528 = vmatpush1.bf16.msra.mxu0 0
        %1529 = vmatprep.subr.bf16.mxu0 0
        %1530 = vmatpush1.bf16.msra.mxu0 0
        %1531 = vmatprep.subr.bf16.mxu0 0
        %1532 = vmatpush1.bf16.msra.mxu0 0
        %1533 = vmatprep.mubr.bf16.mxu0 0
        %1534 = vmatmul.mubr.bf16.gmra.mrb[0].mxu0 %v1499
        %v1535 = vpop.f32.mrb[0].mxu0
        %v1536 = vadd.f32 %v1484, %v1535
        %v1537 = vpop.f32.mrb[0].mxu0
        %v1538 = vpop.f32.mrb[0].mxu0
        %v1539 = vpop.f32.mrb[0].mxu0
        %1540 = vdwg.mxu0
        %v1541 = vmul.f32 %v1536, 0.5
        %v1542 = vmul.f32 %v1536, 0.70710677
        %v1543 = verf.f32.pop %v1542
        %v1544 = vadd.f32 %v1543, 1.0
        %v1545 = vmul.f32 %v1541, %v1544
        %v1546 = vpack.c.bf16 %v1545, %v1545
        %v1547 = vld [vmem:[%s12] sm:$0xf]
        %v1548 = vld [vmem:[%s12 + $0x4] sm:$0xf]
        %v1549 = vld [vmem:[%s12 + $0x8] sm:$0xf]
        %v1550 = vld [vmem:[%s12 + $0xc] sm:$0xf]
        %v1551 = vld [vmem:[%s12 + $0x10] sm:$0xf]
        %v1552 = vld [vmem:[%s12 + $0x14] sm:$0xf]
        %v1553 = vld [vmem:[%s12 + $0x18] sm:$0xf]
        %v1554 = vld [vmem:[%s12 + $0x1c] sm:$0xf]
        %v1555 = vld [vmem:[%s13] sm:$0x1]
        %v1557 = vlaneseq
        %v1558 = vshrl.u32 %v1557, 7
        %v1559 = vsub.s32 0, %v1558
        %v1560 = vrot.slane %v1555, %v1559
        %v1570 = vunpack.c.l.b16 %v1547
        %v1571 = vunpack.c.l.b16 %v1548
        %v1572 = vunpack.c.l.b16 %v1549
        %v1573 = vunpack.c.l.b16 %v1550
        %v1574 = vunpack.c.l.b16 %v1551
        %v1575 = vunpack.c.l.b16 %v1552
        %v1576 = vunpack.c.l.b16 %v1553
        %v1577 = vunpack.c.l.b16 %v1554
        %v1578 = vpack.c.b16 %v1571, %v1570
        %v1579 = vpack.c.b16 %v1573, %v1572
        %v1580 = vpack.c.b16 %v1575, %v1574
        %v1581 = vpack.c.b16 %v1577, %v1576
        %vm1586 = vcmask 523264
        %v1588 = vsel %vm1586, %v1546, 0
        %1590 = vmatprep.subr.bf16.mxu0 0
        %1591 = vmatpush1.bf16.msra.mxu0 %v1578
        %1592 = vmatprep.subr.bf16.mxu0 0
        %1593 = vmatpush1.bf16.msra.mxu0 %v1579
        %1594 = vmatprep.subr.bf16.mxu0 0
        %1595 = vmatpush1.bf16.msra.mxu0 %v1580
        %1596 = vmatprep.subr.bf16.mxu0 0
        %1597 = vmatpush1.bf16.msra.mxu0 %v1581
        %1598 = vmatprep.subr.bf16.mxu0 0
        %1599 = vmatpush1.bf16.msra.mxu0 0
        %1600 = vmatprep.subr.bf16.mxu0 0
        %1601 = vmatpush1.bf16.msra.mxu0 0
        %1602 = vmatprep.subr.bf16.mxu0 0
        %1603 = vmatpush1.bf16.msra.mxu0 0
        %1604 = vmatprep.subr.bf16.mxu0 0
        %1605 = vmatpush1.bf16.msra.mxu0 0
        %1606 = vmatprep.subr.bf16.mxu0 0
        %1607 = vmatpush1.bf16.msra.mxu0 0
        %1608 = vmatprep.subr.bf16.mxu0 0
        %1609 = vmatpush1.bf16.msra.mxu0 0
        %1610 = vmatprep.subr.bf16.mxu0 0
        %1611 = vmatpush1.bf16.msra.mxu0 0
        %1612 = vmatprep.subr.bf16.mxu0 0
        %1613 = vmatpush1.bf16.msra.mxu0 0
        %1614 = vmatprep.subr.bf16.mxu0 0
        %1615 = vmatpush1.bf16.msra.mxu0 0
        %1616 = vmatprep.subr.bf16.mxu0 0
        %1617 = vmatpush1.bf16.msra.mxu0 0
        %1618 = vmatprep.subr.bf16.mxu0 0
        %1619 = vmatpush1.bf16.msra.mxu0 0
        %1620 = vmatprep.subr.bf16.mxu0 0
        %1621 = vmatpush1.bf16.msra.mxu0 0
        %1622 = vmatprep.mubr.bf16.mxu0 0
        %1623 = vmatmul.mubr.bf16.gmra.mrb[0].mxu0 %v1588
        %v1624 = vpop.f32.mrb[0].mxu0
        %v1625 = vadd.f32 %v1560, %v1624
        %v1626 = vpop.f32.mrb[0].mxu0
        %v1627 = vpop.f32.mrb[0].mxu0
        %v1628 = vpop.f32.mrb[0].mxu0
        %1629 = vdwg.mxu0
        %v1630 = vadd.f32 %v1625, %v1443
        %1631 = vst.msk [vmem:[%s556] sm:$0xff] %vm761, %v1630
        %s1632 = sand.u32 %s353, 1
        %s1633 = scalar_lea.sflag [#allocation7], %s1632
        %s1634 = sand.u32 %s353, 1
        %s1635 = smul.addr %s1634, 8
        %s1636 = scalar_lea.vmem [#allocation16], %s1635
        // Predicated region
        $region105: #{tpu_custom_call.1} parent=75 // pred_check
          %p1637 = pneg %p363
        $region106: #{tpu_custom_call.1} parent=75 // pred_check_branch
          %1639 = sbr.rel (%p1637) target = $region108
        $region107: #{tpu_custom_call.1} parent=75 // pred_region
          %s1641 = ssub.s32 128, 128
          %1642 = vsyncadd %s1633, %s1641
          %s1643 = smul.addr %s36, 2
          %s1644 = sadd.s32 %s37, %s1643
          %s1645 = smul.addr %s1644, 128
          %s1646 = scalar_lea.hbm %s14, %s1645
          %s1648 = sshll.u32 %s1636, 4
          %s1649 = int_to_ptr.vmem [resolvable:$true] %s1648
          %1651 = dma.vmem_to_hbm [thread:$0]  %s1649, 128, %s1646, %s1633
        $region108: #{tpu_custom_call.1} parent=75 // pred_fallthru
          _
      $region76: #{tpu_custom_call.1} parent=5 // pred_fallthru
        _
      %p1652 = scmp.le.s32.totalorder 2, %s27
      // Predicated region
      $region109: #{tpu_custom_call.1} parent=5 // pred_check
        %p1653 = pneg %p1652
      $region110: #{tpu_custom_call.1} parent=5 // pred_check_branch
        %1655 = sbr.rel (%p1653) target = $region112
      $region111: #{tpu_custom_call.1} parent=5 // pred_region
        %s1656 = ssub.s32 %s27, 2
        // Predicated region
        $region113: #{tpu_custom_call.1} parent=111 // pred_check
          %p1657 = pneg %p369
        $region114: #{tpu_custom_call.1} parent=111 // pred_check_branch
          %1659 = sbr.rel (%p1657) target = $region116
        $region115: #{tpu_custom_call.1} parent=111 // pred_region
          %s1660 = sand.u32 %s354, 1
          %s1661 = scalar_lea.sflag [#allocation7], %s1660
          %s1662 = sand.u32 %s354, 1
          %s1663 = smul.addr %s1662, 8
          %s1664 = scalar_lea.vmem [#allocation16], %s1663
          %1665 = dma.done %s1661, 128
        $region116: #{tpu_custom_call.1} parent=111 // pred_fallthru
          _
      $region112: #{tpu_custom_call.1} parent=5 // pred_fallthru
        _
    $region6: #{tpu_custom_call.1} parent=1 // loop_footer
      %s31 = sadd.s32 1, %s27
    $region7: #{tpu_custom_call.1} parent=1 // loop_footer_branch
      %26 = sbr.rel target = $region3
    $region8: #{tpu_custom_call.1} parent=1 // loop_exit
      _
    %1666 = vsyncpa [#allocation6], 1
    %s1667 = scalar_lea.sflag [#allocation6], 1
    %1668 = vsyncpa %s1667, 1
    %1669 = vsyncpa [#allocation9], 1
    %1670 = vsyncpa [#allocation12], 1
    %1671 = vsyncpa [#allocation15], 1
    %1672 = vsyncpa [#allocation7], 1
    %s1673 = scalar_lea.sflag [#allocation7], 1
    %1674 = vsyncpa %s1673, 1

</llo_original>
